<compile_context>
chip_gen: v7x
topology: tpu7x:2x2x1
jax: 0.10.0
libtpu: 0.0.40
codegen_flags: <defaults>
</compile_context>

<pallas_src>
import functools

import jax
import jax.numpy as jnp
from jax.experimental import pallas as pl
from jax.experimental.pallas import tpu as pltpu

F = 3                      # number of functions in the set
K = 3                      # variations per function (linear, sinusoidal, spherical)
LANES = 128                # vreg lane width
DEFAULT_BLOCK_ROWS = 1024  # 1024 rows * 128 lanes = 131072 points / grid step


def _round_up(x, m):
    return ((x + m - 1) // m) * m


def _function_set_kernel(g_ref, A_ref, b_ref, w_ref, col_ref,
                         x_ref, y_ref, c_ref,
                         ox_ref, oy_ref, oc_ref, *, block_pts):
    """One (block_rows, 128) tile of stably-sorted points.

    g_ref   : (F+1,) SMEM int32  scalar-prefetched group offsets (cumulative)
    A_ref   : (F, 4) SMEM  flattened 2x2 affine matrices
    b_ref   : (F, 2) SMEM  affine translations
    w_ref   : (F, K) SMEM  variation weights
    col_ref : (F, 1) SMEM  per-function color
    x/y/c_ref   : (block_rows, 128) VMEM  channel slabs (sorted by choice)
    ox/oy/oc_ref: (block_rows, 128) VMEM  output channel slabs
    """
    i = pl.program_id(0)
    tile_start = i * block_pts
    tile_end = tile_start + block_pts

    x = x_ref[...]
    y = y_ref[...]
    c = c_ref[...]

    # Deterministic zeros for any padded tail (stripped by the wrapper).
    ox_ref[...] = jnp.zeros_like(x)
    oy_ref[...] = jnp.zeros_like(y)
    oc_ref[...] = jnp.zeros_like(c)

    # Global (sorted) flat index of each element of the tile.
    row = jax.lax.broadcasted_iota(jnp.int32, x.shape, 0)
    lane = jax.lax.broadcasted_iota(jnp.int32, x.shape, 1)
    gidx = tile_start + row * LANES + lane

    # F is tiny and static: unrolled Python loop; each function is evaluated
    # only if its [start, end) range intersects this tile.
    for f in range(F):
        start_f = g_ref[f]
        end_f = g_ref[f + 1]
        present = jnp.logical_and(start_f < tile_end, end_f > tile_start)

        @pl.when(present)
        def _():
            a00 = A_ref[f, 0]
            a01 = A_ref[f, 1]
            a10 = A_ref[f, 2]
            a11 = A_ref[f, 3]
            tx = b_ref[f, 0]
            ty = b_ref[f, 1]
            w_lin = w_ref[f, 0]
            w_sin = w_ref[f, 1]
            w_sph = w_ref[f, 2]
            col = col_ref[f, 0]

            # SimpleTransform: affine
            xf = a00 * x + a01 * y + tx
            yf = a10 * x + a11 * y + ty

            # VariationSet: weighted sum of flame variations.
            r2 = xf * xf + yf * yf + 1e-6
            inv_r2 = pl.reciprocal(r2)          # one divide instead of two
            vx = w_lin * xf + w_sin * jnp.sin(xf) + w_sph * (xf * inv_r2)
            vy = w_lin * yf + w_sin * jnp.sin(yf) + w_sph * (yf * inv_r2)

            # color blend
            cf = (c + col) * 0.5

            covered = jnp.logical_and(start_f <= tile_start, end_f >= tile_end)

            @pl.when(covered)
            def _():
                # Single function covers the whole tile: no masks, no selects.
                ox_ref[...] = vx
                oy_ref[...] = vy
                oc_ref[...] = cf

            @pl.when(jnp.logical_not(covered))
            def _():
                # Boundary tile: masked merge for this function's range only.
                m = jnp.logical_and(gidx >= start_f, gidx < end_f)
                ox_ref[...] = jnp.where(m, vx, ox_ref[...])
                oy_ref[...] = jnp.where(m, vy, oy_ref[...])
                oc_ref[...] = jnp.where(m, cf, oc_ref[...])


def function_set_forward(points, choices, A, b, w, colors,
                         *, block_rows=DEFAULT_BLOCK_ROWS):
    """points: (N, 3) f32, choices: (N,) int. Returns (N, 3) f32 grouped by choice."""
    n, d = points.shape
    assert d == 3
    choices = choices.astype(jnp.int32)

    # ---- glue (XLA, outside the kernel): stable grouping by function id ----
    perm = jnp.argsort(choices, stable=True)
    ch_sorted = choices[perm]
    # Three 1-D gathers -> per-channel slabs (no (N,3)<->(3,N) transpose pass).
    x_s = points[:, 0][perm]
    y_s = points[:, 1][perm]
    c_s = points[:, 2][perm]

    # group_start[f] .. group_start[f+1] is function f's contiguous range.
    counts = jnp.bincount(ch_sorted, length=F)
    group_start = jnp.concatenate(
        [jnp.zeros((1,), jnp.int32), jnp.cumsum(counts).astype(jnp.int32)])

    # ---- tiling ------------------------------------------------------------
    rows_needed = _round_up(n, LANES) // LANES
    block_rows = max(8, min(block_rows, _round_up(rows_needed, 8)))
    block_rows = _round_up(block_rows, 8)
    block_pts = block_rows * LANES
    n_pad = _round_up(n, block_pts)
    pad = n_pad - n
    # Padded points fall outside every [group_start[f], group_start[f+1])
    # range, so the kernel leaves them at 0 and we strip them below.
    x_s = jnp.pad(x_s, (0, pad))
    y_s = jnp.pad(y_s, (0, pad))
    c_s = jnp.pad(c_s, (0, pad))

    n_rows = n_pad // LANES
    x2 = x_s.reshape(n_rows, LANES)
    y2 = y_s.reshape(n_rows, LANES)
    c2 = c_s.reshape(n_rows, LANES)

    grid = (n_rows // block_rows,)
    smem = pl.BlockSpec(memory_space=pltpu.MemorySpace.SMEM)
    slab = pl.BlockSpec((block_rows, LANES), lambda i, g: (i, 0))

    ox2, oy2, oc2 = pl.pallas_call(
        functools.partial(_function_set_kernel, block_pts=block_pts),
        out_shape=[jax.ShapeDtypeStruct((n_rows, LANES), jnp.float32)] * 3,
        grid_spec=pltpu.PrefetchScalarGridSpec(
            num_scalar_prefetch=1,          # group_start offsets -> SMEM
            grid=grid,
            in_specs=[
                smem, smem, smem, smem,     # A (F,4), b (F,2), w (F,K), colors (F,1)
                slab, slab, slab,           # x, y, c channel slabs
            ],
            out_specs=[slab, slab, slab],
        ),
        compiler_params=pltpu.CompilerParams(
            dimension_semantics=("parallel",)),   # shards grid over v7x's 2 TCs
    )(group_start, A, b, w, colors, x2, y2, c2)

    out = jnp.stack(
        [ox2.reshape(-1), oy2.reshape(-1), oc2.reshape(-1)], axis=1)
    return out[:n]


def _reference_forward(points, choices, A, b, w, colors):
    """Pure-JAX reference (same math, same ordering) for a sanity check."""
    perm = jnp.argsort(choices, stable=True)
    p = points[perm]
    ch = choices[perm]
    x, y, c = p[:, 0], p[:, 1], p[:, 2]
    outs = []
    for f in range(F):
        xf = A[f, 0] * x + A[f, 1] * y + b[f, 0]
        yf = A[f, 2] * x + A[f, 3] * y + b[f, 1]
        r2 = xf * xf + yf * yf + 1e-6
        inv_r2 = 1.0 / r2
        vx = w[f, 0] * xf + w[f, 1] * jnp.sin(xf) + w[f, 2] * (xf * inv_r2)
        vy = w[f, 0] * yf + w[f, 1] * jnp.sin(yf) + w[f, 2] * (yf * inv_r2)
        cf = (c + colors[f, 0]) * 0.5
        outs.append(jnp.stack([vx, vy, cf], axis=1))
    m = ch[:, None]
    out = outs[0]
    for f in range(1, F):
        out = jnp.where(m == f, outs[f], out)
    return out


if __name__ == "__main__":
    key = jax.random.PRNGKey(0)
    k_pts, k_col, k_A, k_b, k_w, k_prob, k_choice, k_fcol = jax.random.split(key, 8)

    N = 2000   # deliberately NOT a multiple of the tile size: exercises padding

    # Input points: xy in [-1, 1], color channel in [0, 1].
    xy = jax.random.uniform(k_pts, (N, 2), minval=-1.0, maxval=1.0)
    c = jax.random.uniform(k_col, (N, 1), minval=0.0, maxval=1.0)
    points = jnp.concatenate([xy, c], axis=1).astype(jnp.float32)

    # Deterministic "parameters" of the FunctionSet (what __init__ would hold).
    A = (0.5 * jax.random.normal(k_A, (F, 4))).astype(jnp.float32)   # 2x2 affine per fn
    b = (0.2 * jax.random.normal(k_b, (F, 2))).astype(jnp.float32)   # translation per fn
    w = jax.random.uniform(k_w, (F, K)).astype(jnp.float32)          # variation weights
    colors = jax.random.uniform(k_fcol, (F, 1)).astype(jnp.float32)  # per-function color

    probs_raw = jax.random.uniform(k_prob, (F,), minval=0.1, maxval=1.0)
    probabilities = (probs_raw / probs_raw.sum()).astype(jnp.float32)

    # Categorical sampling of the function index per point (torch: chooser.sample).
    choices = jax.random.categorical(
        k_choice, jnp.log(probabilities), shape=(N,)).astype(jnp.int32)

    # block_rows=8 keeps the demo tiny while still running multiple grid steps
    # (and boundary tiles); production uses the large DEFAULT_BLOCK_ROWS blocks.
    out = function_set_forward(points, choices, A, b, w, colors, block_rows=8)
    out = jax.block_until_ready(out)

    ref = _reference_forward(points, choices, A, b, w, colors)
    assert out.shape == (N, 3)
    assert jnp.allclose(out, ref, rtol=1e-4, atol=5e-4)

    print("KERNEL_OK")
</pallas_src>

<mosaic_0001>
module attributes {stable_mosaic.version = 11 : i64} {
  func.func @_function_set_kernel(%arg0: i32, %arg1: memref<4xi32, #tpu.memory_space<smem>>, %arg2: memref<3x4xf32, #tpu.memory_space<smem>>, %arg3: memref<3x2xf32, #tpu.memory_space<smem>>, %arg4: memref<3x3xf32, #tpu.memory_space<smem>>, %arg5: memref<3x1xf32, #tpu.memory_space<smem>>, %arg6: memref<8x128xf32, #tpu.memory_space<vmem>>, %arg7: memref<8x128xf32, #tpu.memory_space<vmem>>, %arg8: memref<8x128xf32, #tpu.memory_space<vmem>>, %arg9: memref<8x128xf32, #tpu.memory_space<vmem>>, %arg10: memref<8x128xf32, #tpu.memory_space<vmem>>, %arg11: memref<8x128xf32, #tpu.memory_space<vmem>>) attributes {dimension_semantics = [#tpu.dimension_semantics<parallel>], iteration_bounds = array<i64: 2>, scalar_prefetch = 1 : i64, scratch_operands = 0 : i64, tpu.core_type = #tpu.core_type<tc>, window_params = [{transform_indices = @transform_0, window_bounds = array<i64: 3, 4>}, {transform_indices = @transform_1, window_bounds = array<i64: 3, 2>}, {transform_indices = @transform_2, window_bounds = array<i64: 3, 3>}, {transform_indices = @transform_3, window_bounds = array<i64: 3, 1>}, {transform_indices = @transform_4, window_bounds = array<i64: 8, 128>}, {transform_indices = @transform_5, window_bounds = array<i64: 8, 128>}, {transform_indices = @transform_6, window_bounds = array<i64: 8, 128>}, {transform_indices = @transform_7, window_bounds = array<i64: 8, 128>}, {transform_indices = @transform_8, window_bounds = array<i64: 8, 128>}, {transform_indices = @transform_9, window_bounds = array<i64: 8, 128>}]} {
    %c1024_i32 = arith.constant 1024 : i32
    %0 = arith.muli %arg0, %c1024_i32 : i32
    %c1024_i32_0 = arith.constant 1024 : i32
    %1 = arith.addi %0, %c1024_i32_0 : i32
    %c0 = arith.constant 0 : index
    %c0_1 = arith.constant 0 : index
    %2 = vector.load %arg6[%c0, %c0_1] : memref<8x128xf32, #tpu.memory_space<vmem>>, vector<8x128xf32>
    %c0_2 = arith.constant 0 : index
    %c0_3 = arith.constant 0 : index
    %3 = vector.load %arg7[%c0_2, %c0_3] : memref<8x128xf32, #tpu.memory_space<vmem>>, vector<8x128xf32>
    %c0_4 = arith.constant 0 : index
    %c0_5 = arith.constant 0 : index
    %4 = vector.load %arg8[%c0_4, %c0_5] : memref<8x128xf32, #tpu.memory_space<vmem>>, vector<8x128xf32>
    %cst = arith.constant 0.000000e+00 : f32
    %5 = vector.broadcast %cst : f32 to vector<8x128xf32>
    %c0_6 = arith.constant 0 : index
    %c0_7 = arith.constant 0 : index
    %6 = vector.load %arg9[%c0_6, %c0_7] : memref<8x128xf32, #tpu.memory_space<vmem>>, vector<8x128xf32>
    tpu.vector_store %arg9[%c0_6, %c0_7], %5 {strides = array<i32>} : memref<8x128xf32, #tpu.memory_space<vmem>>, vector<8x128xf32>,
    %cst_8 = arith.constant 0.000000e+00 : f32
    %7 = vector.broadcast %cst_8 : f32 to vector<8x128xf32>
    %c0_9 = arith.constant 0 : index
    %c0_10 = arith.constant 0 : index
    %8 = vector.load %arg10[%c0_9, %c0_10] : memref<8x128xf32, #tpu.memory_space<vmem>>, vector<8x128xf32>
    tpu.vector_store %arg10[%c0_9, %c0_10], %7 {strides = array<i32>} : memref<8x128xf32, #tpu.memory_space<vmem>>, vector<8x128xf32>,
    %cst_11 = arith.constant 0.000000e+00 : f32
    %9 = vector.broadcast %cst_11 : f32 to vector<8x128xf32>
    %c0_12 = arith.constant 0 : index
    %c0_13 = arith.constant 0 : index
    %10 = vector.load %arg11[%c0_12, %c0_13] : memref<8x128xf32, #tpu.memory_space<vmem>>, vector<8x128xf32>
    tpu.vector_store %arg11[%c0_12, %c0_13], %9 {strides = array<i32>} : memref<8x128xf32, #tpu.memory_space<vmem>>, vector<8x128xf32>,
    %11 = tpu.iota {dimensions = array<i32: 0>} : vector<8x128xi32>
    %12 = tpu.iota {dimensions = array<i32: 1>} : vector<8x128xi32>
    %c128_i32 = arith.constant 128 : i32
    %13 = vector.broadcast %c128_i32 : i32 to vector<8x128xi32>
    %14 = arith.muli %11, %13 : vector<8x128xi32>
    %15 = vector.broadcast %0 : i32 to vector<8x128xi32>
    %16 = arith.addi %15, %14 : vector<8x128xi32>
    %17 = arith.addi %16, %12 : vector<8x128xi32>
    %c0_14 = arith.constant 0 : index
    %18 = memref.load %arg1[%c0_14] : memref<4xi32, #tpu.memory_space<smem>>
    %c1 = arith.constant 1 : index
    %19 = memref.load %arg1[%c1] : memref<4xi32, #tpu.memory_space<smem>>
    %20 = arith.cmpi slt, %18, %1 : i32
    %21 = arith.cmpi sgt, %19, %0 : i32
    %22 = arith.andi %20, %21 : i1
    %23 = arith.extui %22 : i1 to i32
    %c0_i32 = arith.constant 0 : i32
    %24 = arith.cmpi ne, %23, %c0_i32 : i32
    scf.if %24 {
      %c0_19 = arith.constant 0 : index
      %c0_20 = arith.constant 0 : index
      %39 = memref.load %arg2[%c0_19, %c0_20] : memref<3x4xf32, #tpu.memory_space<smem>>
      %c0_21 = arith.constant 0 : index
      %c1_22 = arith.constant 1 : index
      %40 = memref.load %arg2[%c0_21, %c1_22] : memref<3x4xf32, #tpu.memory_space<smem>>
      %c0_23 = arith.constant 0 : index
      %c2_24 = arith.constant 2 : index
      %41 = memref.load %arg2[%c0_23, %c2_24] : memref<3x4xf32, #tpu.memory_space<smem>>
      %c0_25 = arith.constant 0 : index
      %c3_26 = arith.constant 3 : index
      %42 = memref.load %arg2[%c0_25, %c3_26] : memref<3x4xf32, #tpu.memory_space<smem>>
      %c0_27 = arith.constant 0 : index
      %c0_28 = arith.constant 0 : index
      %43 = memref.load %arg3[%c0_27, %c0_28] : memref<3x2xf32, #tpu.memory_space<smem>>
      %c0_29 = arith.constant 0 : index
      %c1_30 = arith.constant 1 : index
      %44 = memref.load %arg3[%c0_29, %c1_30] : memref<3x2xf32, #tpu.memory_space<smem>>
      %c0_31 = arith.constant 0 : index
      %c0_32 = arith.constant 0 : index
      %45 = memref.load %arg4[%c0_31, %c0_32] : memref<3x3xf32, #tpu.memory_space<smem>>
      %c0_33 = arith.constant 0 : index
      %c1_34 = arith.constant 1 : index
      %46 = memref.load %arg4[%c0_33, %c1_34] : memref<3x3xf32, #tpu.memory_space<smem>>
      %c0_35 = arith.constant 0 : index
      %c2_36 = arith.constant 2 : index
      %47 = memref.load %arg4[%c0_35, %c2_36] : memref<3x3xf32, #tpu.memory_space<smem>>
      %c0_37 = arith.constant 0 : index
      %c0_38 = arith.constant 0 : index
      %48 = memref.load %arg5[%c0_37, %c0_38] : memref<3x1xf32, #tpu.memory_space<smem>>
      %49 = vector.broadcast %39 : f32 to vector<8x128xf32>
      %50 = arith.mulf %49, %2 : vector<8x128xf32>
      %51 = vector.broadcast %40 : f32 to vector<8x128xf32>
      %52 = arith.mulf %51, %3 : vector<8x128xf32>
      %53 = arith.addf %50, %52 : vector<8x128xf32>
      %54 = vector.broadcast %43 : f32 to vector<8x128xf32>
      %55 = arith.addf %53, %54 : vector<8x128xf32>
      %56 = vector.broadcast %41 : f32 to vector<8x128xf32>
      %57 = arith.mulf %56, %2 : vector<8x128xf32>
      %58 = vector.broadcast %42 : f32 to vector<8x128xf32>
      %59 = arith.mulf %58, %3 : vector<8x128xf32>
      %60 = arith.addf %57, %59 : vector<8x128xf32>
      %61 = vector.broadcast %44 : f32 to vector<8x128xf32>
      %62 = arith.addf %60, %61 : vector<8x128xf32>
      %63 = arith.mulf %55, %55 : vector<8x128xf32>
      %64 = arith.mulf %62, %62 : vector<8x128xf32>
      %65 = arith.addf %63, %64 : vector<8x128xf32>
      %cst_39 = arith.constant 9.99999997E-7 : f32
      %66 = vector.broadcast %cst_39 : f32 to vector<8x128xf32>
      %67 = arith.addf %65, %66 : vector<8x128xf32>
      %68 = tpu.reciprocal %67 : vector<8x128xf32> -> vector<8x128xf32>
      %69 = vector.broadcast %45 : f32 to vector<8x128xf32>
      %70 = arith.mulf %69, %55 : vector<8x128xf32>
      %71 = math.sin %55 : vector<8x128xf32>
      %72 = vector.broadcast %46 : f32 to vector<8x128xf32>
      %73 = arith.mulf %72, %71 : vector<8x128xf32>
      %74 = arith.addf %70, %73 : vector<8x128xf32>
      %75 = arith.mulf %55, %68 : vector<8x128xf32>
      %76 = vector.broadcast %47 : f32 to vector<8x128xf32>
      %77 = arith.mulf %76, %75 : vector<8x128xf32>
      %78 = arith.addf %74, %77 : vector<8x128xf32>
      %79 = vector.broadcast %45 : f32 to vector<8x128xf32>
      %80 = arith.mulf %79, %62 : vector<8x128xf32>
      %81 = math.sin %62 : vector<8x128xf32>
      %82 = vector.broadcast %46 : f32 to vector<8x128xf32>
      %83 = arith.mulf %82, %81 : vector<8x128xf32>
      %84 = arith.addf %80, %83 : vector<8x128xf32>
      %85 = arith.mulf %62, %68 : vector<8x128xf32>
      %86 = vector.broadcast %47 : f32 to vector<8x128xf32>
      %87 = arith.mulf %86, %85 : vector<8x128xf32>
      %88 = arith.addf %84, %87 : vector<8x128xf32>
      %89 = vector.broadcast %48 : f32 to vector<8x128xf32>
      %90 = arith.addf %4, %89 : vector<8x128xf32>
      %cst_40 = arith.constant 5.000000e-01 : f32
      %91 = vector.broadcast %cst_40 : f32 to vector<8x128xf32>
      %92 = arith.mulf %90, %91 : vector<8x128xf32>
      %93 = arith.cmpi sle, %18, %0 : i32
      %94 = arith.cmpi sge, %19, %1 : i32
      %95 = arith.andi %93, %94 : i1
      %96 = arith.extui %95 : i1 to i32
      %c0_i32_41 = arith.constant 0 : i32
      %97 = arith.cmpi ne, %96, %c0_i32_41 : i32
      scf.if %97 {
        %c0_43 = arith.constant 0 : index
        %c0_44 = arith.constant 0 : index
        %101 = vector.load %arg9[%c0_43, %c0_44] : memref<8x128xf32, #tpu.memory_space<vmem>>, vector<8x128xf32>
        tpu.vector_store %arg9[%c0_43, %c0_44], %78 {strides = array<i32>} : memref<8x128xf32, #tpu.memory_space<vmem>>, vector<8x128xf32>,
        %c0_45 = arith.constant 0 : index
        %c0_46 = arith.constant 0 : index
        %102 = vector.load %arg10[%c0_45, %c0_46] : memref<8x128xf32, #tpu.memory_space<vmem>>, vector<8x128xf32>
        tpu.vector_store %arg10[%c0_45, %c0_46], %88 {strides = array<i32>} : memref<8x128xf32, #tpu.memory_space<vmem>>, vector<8x128xf32>,
        %c0_47 = arith.constant 0 : index
        %c0_48 = arith.constant 0 : index
        %103 = vector.load %arg11[%c0_47, %c0_48] : memref<8x128xf32, #tpu.memory_space<vmem>>, vector<8x128xf32>
        tpu.vector_store %arg11[%c0_47, %c0_48], %92 {strides = array<i32>} : memref<8x128xf32, #tpu.memory_space<vmem>>, vector<8x128xf32>,
      } else {
      }
      %true = arith.constant true
      %98 = arith.xori %95, %true : i1
      %99 = arith.extui %98 : i1 to i32
      %c0_i32_42 = arith.constant 0 : i32
      %100 = arith.cmpi ne, %99, %c0_i32_42 : i32
      scf.if %100 {
        %101 = vector.broadcast %18 : i32 to vector<8x128xi32>
        %102 = arith.cmpi sge, %17, %101 : vector<8x128xi32>
        %103 = vector.broadcast %19 : i32 to vector<8x128xi32>
        %104 = arith.cmpi slt, %17, %103 : vector<8x128xi32>
        %105 = arith.andi %102, %104 : vector<8x128xi1>
        %c0_43 = arith.constant 0 : index
        %c0_44 = arith.constant 0 : index
        %106 = vector.load %arg9[%c0_43, %c0_44] : memref<8x128xf32, #tpu.memory_space<vmem>>, vector<8x128xf32>
        %107 = arith.select %105, %78, %106 : vector<8x128xi1>, vector<8x128xf32>
        %c0_45 = arith.constant 0 : index
        %c0_46 = arith.constant 0 : index
        %108 = vector.load %arg9[%c0_45, %c0_46] : memref<8x128xf32, #tpu.memory_space<vmem>>, vector<8x128xf32>
        tpu.vector_store %arg9[%c0_45, %c0_46], %107 {strides = array<i32>} : memref<8x128xf32, #tpu.memory_space<vmem>>, vector<8x128xf32>,
        %c0_47 = arith.constant 0 : index
        %c0_48 = arith.constant 0 : index
        %109 = vector.load %arg10[%c0_47, %c0_48] : memref<8x128xf32, #tpu.memory_space<vmem>>, vector<8x128xf32>
        %110 = arith.select %105, %88, %109 : vector<8x128xi1>, vector<8x128xf32>
        %c0_49 = arith.constant 0 : index
        %c0_50 = arith.constant 0 : index
        %111 = vector.load %arg10[%c0_49, %c0_50] : memref<8x128xf32, #tpu.memory_space<vmem>>, vector<8x128xf32>
        tpu.vector_store %arg10[%c0_49, %c0_50], %110 {strides = array<i32>} : memref<8x128xf32, #tpu.memory_space<vmem>>, vector<8x128xf32>,
        %c0_51 = arith.constant 0 : index
        %c0_52 = arith.constant 0 : index
        %112 = vector.load %arg11[%c0_51, %c0_52] : memref<8x128xf32, #tpu.memory_space<vmem>>, vector<8x128xf32>
        %113 = arith.select %105, %92, %112 : vector<8x128xi1>, vector<8x128xf32>
        %c0_53 = arith.constant 0 : index
        %c0_54 = arith.constant 0 : index
        %114 = vector.load %arg11[%c0_53, %c0_54] : memref<8x128xf32, #tpu.memory_space<vmem>>, vector<8x128xf32>
        tpu.vector_store %arg11[%c0_53, %c0_54], %113 {strides = array<i32>} : memref<8x128xf32, #tpu.memory_space<vmem>>, vector<8x128xf32>,
      } else {
      }
    } else {
    }
    %c1_15 = arith.constant 1 : index
    %25 = memref.load %arg1[%c1_15] : memref<4xi32, #tpu.memory_space<smem>>
    %c2 = arith.constant 2 : index
    %26 = memref.load %arg1[%c2] : memref<4xi32, #tpu.memory_space<smem>>
    %27 = arith.cmpi slt, %25, %1 : i32
    %28 = arith.cmpi sgt, %26, %0 : i32
    %29 = arith.andi %27, %28 : i1
    %30 = arith.extui %29 : i1 to i32
    %c0_i32_16 = arith.constant 0 : i32
    %31 = arith.cmpi ne, %30, %c0_i32_16 : i32
    scf.if %31 {
      %c1_19 = arith.constant 1 : index
      %c0_20 = arith.constant 0 : index
      %39 = memref.load %arg2[%c1_19, %c0_20] : memref<3x4xf32, #tpu.memory_space<smem>>
      %c1_21 = arith.constant 1 : index
      %c1_22 = arith.constant 1 : index
      %40 = memref.load %arg2[%c1_21, %c1_22] : memref<3x4xf32, #tpu.memory_space<smem>>
      %c1_23 = arith.constant 1 : index
      %c2_24 = arith.constant 2 : index
      %41 = memref.load %arg2[%c1_23, %c2_24] : memref<3x4xf32, #tpu.memory_space<smem>>
      %c1_25 = arith.constant 1 : index
      %c3_26 = arith.constant 3 : index
      %42 = memref.load %arg2[%c1_25, %c3_26] : memref<3x4xf32, #tpu.memory_space<smem>>
      %c1_27 = arith.constant 1 : index
      %c0_28 = arith.constant 0 : index
      %43 = memref.load %arg3[%c1_27, %c0_28] : memref<3x2xf32, #tpu.memory_space<smem>>
      %c1_29 = arith.constant 1 : index
      %c1_30 = arith.constant 1 : index
      %44 = memref.load %arg3[%c1_29, %c1_30] : memref<3x2xf32, #tpu.memory_space<smem>>
      %c1_31 = arith.constant 1 : index
      %c0_32 = arith.constant 0 : index
      %45 = memref.load %arg4[%c1_31, %c0_32] : memref<3x3xf32, #tpu.memory_space<smem>>
      %c1_33 = arith.constant 1 : index
      %c1_34 = arith.constant 1 : index
      %46 = memref.load %arg4[%c1_33, %c1_34] : memref<3x3xf32, #tpu.memory_space<smem>>
      %c1_35 = arith.constant 1 : index
      %c2_36 = arith.constant 2 : index
      %47 = memref.load %arg4[%c1_35, %c2_36] : memref<3x3xf32, #tpu.memory_space<smem>>
      %c1_37 = arith.constant 1 : index
      %c0_38 = arith.constant 0 : index
      %48 = memref.load %arg5[%c1_37, %c0_38] : memref<3x1xf32, #tpu.memory_space<smem>>
      %49 = vector.broadcast %39 : f32 to vector<8x128xf32>
      %50 = arith.mulf %49, %2 : vector<8x128xf32>
      %51 = vector.broadcast %40 : f32 to vector<8x128xf32>
      %52 = arith.mulf %51, %3 : vector<8x128xf32>
      %53 = arith.addf %50, %52 : vector<8x128xf32>
      %54 = vector.broadcast %43 : f32 to vector<8x128xf32>
      %55 = arith.addf %53, %54 : vector<8x128xf32>
      %56 = vector.broadcast %41 : f32 to vector<8x128xf32>
      %57 = arith.mulf %56, %2 : vector<8x128xf32>
      %58 = vector.broadcast %42 : f32 to vector<8x128xf32>
      %59 = arith.mulf %58, %3 : vector<8x128xf32>
      %60 = arith.addf %57, %59 : vector<8x128xf32>
      %61 = vector.broadcast %44 : f32 to vector<8x128xf32>
      %62 = arith.addf %60, %61 : vector<8x128xf32>
      %63 = arith.mulf %55, %55 : vector<8x128xf32>
      %64 = arith.mulf %62, %62 : vector<8x128xf32>
      %65 = arith.addf %63, %64 : vector<8x128xf32>
      %cst_39 = arith.constant 9.99999997E-7 : f32
      %66 = vector.broadcast %cst_39 : f32 to vector<8x128xf32>
      %67 = arith.addf %65, %66 : vector<8x128xf32>
      %68 = tpu.reciprocal %67 : vector<8x128xf32> -> vector<8x128xf32>
      %69 = vector.broadcast %45 : f32 to vector<8x128xf32>
      %70 = arith.mulf %69, %55 : vector<8x128xf32>
      %71 = math.sin %55 : vector<8x128xf32>
      %72 = vector.broadcast %46 : f32 to vector<8x128xf32>
      %73 = arith.mulf %72, %71 : vector<8x128xf32>
      %74 = arith.addf %70, %73 : vector<8x128xf32>
      %75 = arith.mulf %55, %68 : vector<8x128xf32>
      %76 = vector.broadcast %47 : f32 to vector<8x128xf32>
      %77 = arith.mulf %76, %75 : vector<8x128xf32>
      %78 = arith.addf %74, %77 : vector<8x128xf32>
      %79 = vector.broadcast %45 : f32 to vector<8x128xf32>
      %80 = arith.mulf %79, %62 : vector<8x128xf32>
      %81 = math.sin %62 : vector<8x128xf32>
      %82 = vector.broadcast %46 : f32 to vector<8x128xf32>
      %83 = arith.mulf %82, %81 : vector<8x128xf32>
      %84 = arith.addf %80, %83 : vector<8x128xf32>
      %85 = arith.mulf %62, %68 : vector<8x128xf32>
      %86 = vector.broadcast %47 : f32 to vector<8x128xf32>
      %87 = arith.mulf %86, %85 : vector<8x128xf32>
      %88 = arith.addf %84, %87 : vector<8x128xf32>
      %89 = vector.broadcast %48 : f32 to vector<8x128xf32>
      %90 = arith.addf %4, %89 : vector<8x128xf32>
      %cst_40 = arith.constant 5.000000e-01 : f32
      %91 = vector.broadcast %cst_40 : f32 to vector<8x128xf32>
      %92 = arith.mulf %90, %91 : vector<8x128xf32>
      %93 = arith.cmpi sle, %25, %0 : i32
      %94 = arith.cmpi sge, %26, %1 : i32
      %95 = arith.andi %93, %94 : i1
      %96 = arith.extui %95 : i1 to i32
      %c0_i32_41 = arith.constant 0 : i32
      %97 = arith.cmpi ne, %96, %c0_i32_41 : i32
      scf.if %97 {
        %c0_43 = arith.constant 0 : index
        %c0_44 = arith.constant 0 : index
        %101 = vector.load %arg9[%c0_43, %c0_44] : memref<8x128xf32, #tpu.memory_space<vmem>>, vector<8x128xf32>
        tpu.vector_store %arg9[%c0_43, %c0_44], %78 {strides = array<i32>} : memref<8x128xf32, #tpu.memory_space<vmem>>, vector<8x128xf32>,
        %c0_45 = arith.constant 0 : index
        %c0_46 = arith.constant 0 : index
        %102 = vector.load %arg10[%c0_45, %c0_46] : memref<8x128xf32, #tpu.memory_space<vmem>>, vector<8x128xf32>
        tpu.vector_store %arg10[%c0_45, %c0_46], %88 {strides = array<i32>} : memref<8x128xf32, #tpu.memory_space<vmem>>, vector<8x128xf32>,
        %c0_47 = arith.constant 0 : index
        %c0_48 = arith.constant 0 : index
        %103 = vector.load %arg11[%c0_47, %c0_48] : memref<8x128xf32, #tpu.memory_space<vmem>>, vector<8x128xf32>
        tpu.vector_store %arg11[%c0_47, %c0_48], %92 {strides = array<i32>} : memref<8x128xf32, #tpu.memory_space<vmem>>, vector<8x128xf32>,
      } else {
      }
      %true = arith.constant true
      %98 = arith.xori %95, %true : i1
      %99 = arith.extui %98 : i1 to i32
      %c0_i32_42 = arith.constant 0 : i32
      %100 = arith.cmpi ne, %99, %c0_i32_42 : i32
      scf.if %100 {
        %101 = vector.broadcast %25 : i32 to vector<8x128xi32>
        %102 = arith.cmpi sge, %17, %101 : vector<8x128xi32>
        %103 = vector.broadcast %26 : i32 to vector<8x128xi32>
        %104 = arith.cmpi slt, %17, %103 : vector<8x128xi32>
        %105 = arith.andi %102, %104 : vector<8x128xi1>
        %c0_43 = arith.constant 0 : index
        %c0_44 = arith.constant 0 : index
        %106 = vector.load %arg9[%c0_43, %c0_44] : memref<8x128xf32, #tpu.memory_space<vmem>>, vector<8x128xf32>
        %107 = arith.select %105, %78, %106 : vector<8x128xi1>, vector<8x128xf32>
        %c0_45 = arith.constant 0 : index
        %c0_46 = arith.constant 0 : index
        %108 = vector.load %arg9[%c0_45, %c0_46] : memref<8x128xf32, #tpu.memory_space<vmem>>, vector<8x128xf32>
        tpu.vector_store %arg9[%c0_45, %c0_46], %107 {strides = array<i32>} : memref<8x128xf32, #tpu.memory_space<vmem>>, vector<8x128xf32>,
        %c0_47 = arith.constant 0 : index
        %c0_48 = arith.constant 0 : index
        %109 = vector.load %arg10[%c0_47, %c0_48] : memref<8x128xf32, #tpu.memory_space<vmem>>, vector<8x128xf32>
        %110 = arith.select %105, %88, %109 : vector<8x128xi1>, vector<8x128xf32>
        %c0_49 = arith.constant 0 : index
        %c0_50 = arith.constant 0 : index
        %111 = vector.load %arg10[%c0_49, %c0_50] : memref<8x128xf32, #tpu.memory_space<vmem>>, vector<8x128xf32>
        tpu.vector_store %arg10[%c0_49, %c0_50], %110 {strides = array<i32>} : memref<8x128xf32, #tpu.memory_space<vmem>>, vector<8x128xf32>,
        %c0_51 = arith.constant 0 : index
        %c0_52 = arith.constant 0 : index
        %112 = vector.load %arg11[%c0_51, %c0_52] : memref<8x128xf32, #tpu.memory_space<vmem>>, vector<8x128xf32>
        %113 = arith.select %105, %92, %112 : vector<8x128xi1>, vector<8x128xf32>
        %c0_53 = arith.constant 0 : index
        %c0_54 = arith.constant 0 : index
        %114 = vector.load %arg11[%c0_53, %c0_54] : memref<8x128xf32, #tpu.memory_space<vmem>>, vector<8x128xf32>
        tpu.vector_store %arg11[%c0_53, %c0_54], %113 {strides = array<i32>} : memref<8x128xf32, #tpu.memory_space<vmem>>, vector<8x128xf32>,
      } else {
      }
    } else {
    }
    %c2_17 = arith.constant 2 : index
    %32 = memref.load %arg1[%c2_17] : memref<4xi32, #tpu.memory_space<smem>>
    %c3 = arith.constant 3 : index
    %33 = memref.load %arg1[%c3] : memref<4xi32, #tpu.memory_space<smem>>
    %34 = arith.cmpi slt, %32, %1 : i32
    %35 = arith.cmpi sgt, %33, %0 : i32
    %36 = arith.andi %34, %35 : i1
    %37 = arith.extui %36 : i1 to i32
    %c0_i32_18 = arith.constant 0 : i32
    %38 = arith.cmpi ne, %37, %c0_i32_18 : i32
    scf.if %38 {
      %c2_19 = arith.constant 2 : index
      %c0_20 = arith.constant 0 : index
      %39 = memref.load %arg2[%c2_19, %c0_20] : memref<3x4xf32, #tpu.memory_space<smem>>
      %c2_21 = arith.constant 2 : index
      %c1_22 = arith.constant 1 : index
      %40 = memref.load %arg2[%c2_21, %c1_22] : memref<3x4xf32, #tpu.memory_space<smem>>
      %c2_23 = arith.constant 2 : index
      %c2_24 = arith.constant 2 : index
      %41 = memref.load %arg2[%c2_23, %c2_24] : memref<3x4xf32, #tpu.memory_space<smem>>
      %c2_25 = arith.constant 2 : index
      %c3_26 = arith.constant 3 : index
      %42 = memref.load %arg2[%c2_25, %c3_26] : memref<3x4xf32, #tpu.memory_space<smem>>
      %c2_27 = arith.constant 2 : index
      %c0_28 = arith.constant 0 : index
      %43 = memref.load %arg3[%c2_27, %c0_28] : memref<3x2xf32, #tpu.memory_space<smem>>
      %c2_29 = arith.constant 2 : index
      %c1_30 = arith.constant 1 : index
      %44 = memref.load %arg3[%c2_29, %c1_30] : memref<3x2xf32, #tpu.memory_space<smem>>
      %c2_31 = arith.constant 2 : index
      %c0_32 = arith.constant 0 : index
      %45 = memref.load %arg4[%c2_31, %c0_32] : memref<3x3xf32, #tpu.memory_space<smem>>
      %c2_33 = arith.constant 2 : index
      %c1_34 = arith.constant 1 : index
      %46 = memref.load %arg4[%c2_33, %c1_34] : memref<3x3xf32, #tpu.memory_space<smem>>
      %c2_35 = arith.constant 2 : index
      %c2_36 = arith.constant 2 : index
      %47 = memref.load %arg4[%c2_35, %c2_36] : memref<3x3xf32, #tpu.memory_space<smem>>
      %c2_37 = arith.constant 2 : index
      %c0_38 = arith.constant 0 : index
      %48 = memref.load %arg5[%c2_37, %c0_38] : memref<3x1xf32, #tpu.memory_space<smem>>
      %49 = vector.broadcast %39 : f32 to vector<8x128xf32>
      %50 = arith.mulf %49, %2 : vector<8x128xf32>
      %51 = vector.broadcast %40 : f32 to vector<8x128xf32>
      %52 = arith.mulf %51, %3 : vector<8x128xf32>
      %53 = arith.addf %50, %52 : vector<8x128xf32>
      %54 = vector.broadcast %43 : f32 to vector<8x128xf32>
      %55 = arith.addf %53, %54 : vector<8x128xf32>
      %56 = vector.broadcast %41 : f32 to vector<8x128xf32>
      %57 = arith.mulf %56, %2 : vector<8x128xf32>
      %58 = vector.broadcast %42 : f32 to vector<8x128xf32>
      %59 = arith.mulf %58, %3 : vector<8x128xf32>
      %60 = arith.addf %57, %59 : vector<8x128xf32>
      %61 = vector.broadcast %44 : f32 to vector<8x128xf32>
      %62 = arith.addf %60, %61 : vector<8x128xf32>
      %63 = arith.mulf %55, %55 : vector<8x128xf32>
      %64 = arith.mulf %62, %62 : vector<8x128xf32>
      %65 = arith.addf %63, %64 : vector<8x128xf32>
      %cst_39 = arith.constant 9.99999997E-7 : f32
      %66 = vector.broadcast %cst_39 : f32 to vector<8x128xf32>
      %67 = arith.addf %65, %66 : vector<8x128xf32>
      %68 = tpu.reciprocal %67 : vector<8x128xf32> -> vector<8x128xf32>
      %69 = vector.broadcast %45 : f32 to vector<8x128xf32>
      %70 = arith.mulf %69, %55 : vector<8x128xf32>
      %71 = math.sin %55 : vector<8x128xf32>
      %72 = vector.broadcast %46 : f32 to vector<8x128xf32>
      %73 = arith.mulf %72, %71 : vector<8x128xf32>
      %74 = arith.addf %70, %73 : vector<8x128xf32>
      %75 = arith.mulf %55, %68 : vector<8x128xf32>
      %76 = vector.broadcast %47 : f32 to vector<8x128xf32>
      %77 = arith.mulf %76, %75 : vector<8x128xf32>
      %78 = arith.addf %74, %77 : vector<8x128xf32>
      %79 = vector.broadcast %45 : f32 to vector<8x128xf32>
      %80 = arith.mulf %79, %62 : vector<8x128xf32>
      %81 = math.sin %62 : vector<8x128xf32>
      %82 = vector.broadcast %46 : f32 to vector<8x128xf32>
      %83 = arith.mulf %82, %81 : vector<8x128xf32>
      %84 = arith.addf %80, %83 : vector<8x128xf32>
      %85 = arith.mulf %62, %68 : vector<8x128xf32>
      %86 = vector.broadcast %47 : f32 to vector<8x128xf32>
      %87 = arith.mulf %86, %85 : vector<8x128xf32>
      %88 = arith.addf %84, %87 : vector<8x128xf32>
      %89 = vector.broadcast %48 : f32 to vector<8x128xf32>
      %90 = arith.addf %4, %89 : vector<8x128xf32>
      %cst_40 = arith.constant 5.000000e-01 : f32
      %91 = vector.broadcast %cst_40 : f32 to vector<8x128xf32>
      %92 = arith.mulf %90, %91 : vector<8x128xf32>
      %93 = arith.cmpi sle, %32, %0 : i32
      %94 = arith.cmpi sge, %33, %1 : i32
      %95 = arith.andi %93, %94 : i1
      %96 = arith.extui %95 : i1 to i32
      %c0_i32_41 = arith.constant 0 : i32
      %97 = arith.cmpi ne, %96, %c0_i32_41 : i32
      scf.if %97 {
        %c0_43 = arith.constant 0 : index
        %c0_44 = arith.constant 0 : index
        %101 = vector.load %arg9[%c0_43, %c0_44] : memref<8x128xf32, #tpu.memory_space<vmem>>, vector<8x128xf32>
        tpu.vector_store %arg9[%c0_43, %c0_44], %78 {strides = array<i32>} : memref<8x128xf32, #tpu.memory_space<vmem>>, vector<8x128xf32>,
        %c0_45 = arith.constant 0 : index
        %c0_46 = arith.constant 0 : index
        %102 = vector.load %arg10[%c0_45, %c0_46] : memref<8x128xf32, #tpu.memory_space<vmem>>, vector<8x128xf32>
        tpu.vector_store %arg10[%c0_45, %c0_46], %88 {strides = array<i32>} : memref<8x128xf32, #tpu.memory_space<vmem>>, vector<8x128xf32>,
        %c0_47 = arith.constant 0 : index
        %c0_48 = arith.constant 0 : index
        %103 = vector.load %arg11[%c0_47, %c0_48] : memref<8x128xf32, #tpu.memory_space<vmem>>, vector<8x128xf32>
        tpu.vector_store %arg11[%c0_47, %c0_48], %92 {strides = array<i32>} : memref<8x128xf32, #tpu.memory_space<vmem>>, vector<8x128xf32>,
      } else {
      }
      %true = arith.constant true
      %98 = arith.xori %95, %true : i1
      %99 = arith.extui %98 : i1 to i32
      %c0_i32_42 = arith.constant 0 : i32
      %100 = arith.cmpi ne, %99, %c0_i32_42 : i32
      scf.if %100 {
        %101 = vector.broadcast %32 : i32 to vector<8x128xi32>
        %102 = arith.cmpi sge, %17, %101 : vector<8x128xi32>
        %103 = vector.broadcast %33 : i32 to vector<8x128xi32>
        %104 = arith.cmpi slt, %17, %103 : vector<8x128xi32>
        %105 = arith.andi %102, %104 : vector<8x128xi1>
        %c0_43 = arith.constant 0 : index
        %c0_44 = arith.constant 0 : index
        %106 = vector.load %arg9[%c0_43, %c0_44] : memref<8x128xf32, #tpu.memory_space<vmem>>, vector<8x128xf32>
        %107 = arith.select %105, %78, %106 : vector<8x128xi1>, vector<8x128xf32>
        %c0_45 = arith.constant 0 : index
        %c0_46 = arith.constant 0 : index
        %108 = vector.load %arg9[%c0_45, %c0_46] : memref<8x128xf32, #tpu.memory_space<vmem>>, vector<8x128xf32>
        tpu.vector_store %arg9[%c0_45, %c0_46], %107 {strides = array<i32>} : memref<8x128xf32, #tpu.memory_space<vmem>>, vector<8x128xf32>,
        %c0_47 = arith.constant 0 : index
        %c0_48 = arith.constant 0 : index
        %109 = vector.load %arg10[%c0_47, %c0_48] : memref<8x128xf32, #tpu.memory_space<vmem>>, vector<8x128xf32>
        %110 = arith.select %105, %88, %109 : vector<8x128xi1>, vector<8x128xf32>
        %c0_49 = arith.constant 0 : index
        %c0_50 = arith.constant 0 : index
        %111 = vector.load %arg10[%c0_49, %c0_50] : memref<8x128xf32, #tpu.memory_space<vmem>>, vector<8x128xf32>
        tpu.vector_store %arg10[%c0_49, %c0_50], %110 {strides = array<i32>} : memref<8x128xf32, #tpu.memory_space<vmem>>, vector<8x128xf32>,
        %c0_51 = arith.constant 0 : index
        %c0_52 = arith.constant 0 : index
        %112 = vector.load %arg11[%c0_51, %c0_52] : memref<8x128xf32, #tpu.memory_space<vmem>>, vector<8x128xf32>
        %113 = arith.select %105, %92, %112 : vector<8x128xi1>, vector<8x128xf32>
        %c0_53 = arith.constant 0 : index
        %c0_54 = arith.constant 0 : index
        %114 = vector.load %arg11[%c0_53, %c0_54] : memref<8x128xf32, #tpu.memory_space<vmem>>, vector<8x128xf32>
        tpu.vector_store %arg11[%c0_53, %c0_54], %113 {strides = array<i32>} : memref<8x128xf32, #tpu.memory_space<vmem>>, vector<8x128xf32>,
      } else {
      }
    } else {
    }
    return
  }
  func.func @transform_0(%arg0: i32, %arg1: memref<4xi32, #tpu.memory_space<smem>>) -> (i32, i32) {
    %c0_i32 = arith.constant 0 : i32
    %c0_i32_0 = arith.constant 0 : i32
    %c0_i32_1 = arith.constant 0 : i32
    return %c0_i32, %c0_i32_0 : i32, i32
  }
  func.func @transform_1(%arg0: i32, %arg1: memref<4xi32, #tpu.memory_space<smem>>) -> (i32, i32) {
    %c0_i32 = arith.constant 0 : i32
    %c0_i32_0 = arith.constant 0 : i32
    %c0_i32_1 = arith.constant 0 : i32
    return %c0_i32, %c0_i32_0 : i32, i32
  }
  func.func @transform_2(%arg0: i32, %arg1: memref<4xi32, #tpu.memory_space<smem>>) -> (i32, i32) {
    %c0_i32 = arith.constant 0 : i32
    %c0_i32_0 = arith.constant 0 : i32
    %c0_i32_1 = arith.constant 0 : i32
    return %c0_i32, %c0_i32_0 : i32, i32
  }
  func.func @transform_3(%arg0: i32, %arg1: memref<4xi32, #tpu.memory_space<smem>>) -> (i32, i32) {
    %c0_i32 = arith.constant 0 : i32
    %c0_i32_0 = arith.constant 0 : i32
    %c0_i32_1 = arith.constant 0 : i32
    return %c0_i32, %c0_i32_0 : i32, i32
  }
  func.func @transform_4(%arg0: i32, %arg1: memref<4xi32, #tpu.memory_space<smem>>) -> (i32, i32) {
    %c0_i32 = arith.constant 0 : i32
    %c0_i32_0 = arith.constant 0 : i32
    return %arg0, %c0_i32 : i32, i32
  }
  func.func @transform_5(%arg0: i32, %arg1: memref<4xi32, #tpu.memory_space<smem>>) -> (i32, i32) {
    %c0_i32 = arith.constant 0 : i32
    %c0_i32_0 = arith.constant 0 : i32
    return %arg0, %c0_i32 : i32, i32
  }
  func.func @transform_6(%arg0: i32, %arg1: memref<4xi32, #tpu.memory_space<smem>>) -> (i32, i32) {
    %c0_i32 = arith.constant 0 : i32
    %c0_i32_0 = arith.constant 0 : i32
    return %arg0, %c0_i32 : i32, i32
  }
  func.func @transform_7(%arg0: i32, %arg1: memref<4xi32, #tpu.memory_space<smem>>) -> (i32, i32) {
    %c0_i32 = arith.constant 0 : i32
    %c0_i32_0 = arith.constant 0 : i32
    return %arg0, %c0_i32 : i32, i32
  }
  func.func @transform_8(%arg0: i32, %arg1: memref<4xi32, #tpu.memory_space<smem>>) -> (i32, i32) {
    %c0_i32 = arith.constant 0 : i32
    %c0_i32_0 = arith.constant 0 : i32
    return %arg0, %c0_i32 : i32, i32
  }
  func.func @transform_9(%arg0: i32, %arg1: memref<4xi32, #tpu.memory_space<smem>>) -> (i32, i32) {
    %c0_i32 = arith.constant 0 : i32
    %c0_i32_0 = arith.constant 0 : i32
    return %arg0, %c0_i32 : i32, i32
  }
}

</mosaic_0001>

<llo_original>
// kernel: tpu_custom_call.1
$region0: #{tpu_custom_call.1}
  #allocation0 [shape = 'u32[]', space=smem, size = 0x4, offset = 0x4, fixed_abs, tag = 'smem constant byte address 0x4 - core index']
  #allocation1 [shape = 'u32[144,128]{1,0:T(1,128)}', space=vmem, size = 0x12000, scoped, tag = 'internal scratch']
  #allocation2 [shape = 's32[1]{0}', space=sflag, size = 0x4, scoped, tag = 'scoped memory for tpu_custom_call.1']
  #allocation3 [shape = 'u8[512]{0}', space=smem, size = 0x200, scoped, tag = 'prefetched SMEM operand 0']
  %s0 = inlined_call_operand.vmem [shape: s32[4], index: 0, kind: input, shape index: {}]
  %s1 = inlined_call_operand.hbm [shape: f32[3,4], index: 1, kind: input, shape index: {}]
  %s2 = inlined_call_operand.vmem [shape: f32[3,2], index: 2, kind: input, shape index: {}]
  %s3 = inlined_call_operand.hbm [shape: f32[3,3], index: 3, kind: input, shape index: {}]
  %s4 = inlined_call_operand.vmem [shape: f32[3,1], index: 4, kind: input, shape index: {}]
  %s5 = inlined_call_operand.vmem [shape: f32[16,128], index: 5, kind: input, shape index: {}]
  %s6 = inlined_call_operand.vmem [shape: f32[16,128], index: 6, kind: input, shape index: {}]
  %s7 = inlined_call_operand.hbm [shape: f32[16,128], index: 7, kind: input, shape index: {}]
  %s8 = inlined_call_operand.hbm [shape: f32[16,128], index: 8, kind: output, shape index: {0}]
  %s9 = inlined_call_operand.hbm [shape: f32[16,128], index: 9, kind: output, shape index: {1}]
  %s10 = inlined_call_operand.hbm [shape: f32[16,128], index: 10, kind: output, shape index: {2}]
  %11 = xla_tuple %s8, %s9, %s10
  %s12 = sld [smem:[#allocation0]]
  $region133: #{tpu_custom_call.1} parent=0
    _
  %s14 = ssub.s32 1, %s12
  %s15 = scalar_select 0, %s14, %s12
  %s16 = sshll.u32 %s0, 4
  %s17 = int_to_ptr.vmem [resolvable:$true] %s16
  %19 = dma.vmem_to_smem %s17, 16, [#allocation3], [#allocation2]
  %20 = dma.done [#allocation2], 16
  %21 = sfence
  $region1: #{tpu_custom_call.1} parent=0
    #allocation4 [shape = 'u8[2048]{0}', space=smem, size = 0x800, scoped, tag = 'input window, operand 1, single buffered']
    #allocation5 [shape = 's32[2]{0}', space=sflag, size = 0x8, scoped, tag = 'scoped memory for tpu_custom_call.1']
    #allocation6 [shape = 's32[2]{0}', space=sflag, size = 0x8, scoped, tag = 'scoped memory for tpu_custom_call.1']
    #allocation7 [shape = 's32[2]{0}', space=sflag, size = 0x8, scoped, tag = 'scoped memory for tpu_custom_call.1']
    #allocation8 [shape = 's32[2]{0}', space=sflag, size = 0x8, scoped, tag = 'scoped memory for tpu_custom_call.1']
    #allocation9 [shape = 'u8[2048]{0}', space=smem, size = 0x800, scoped, tag = 'input window, operand 2, single buffered']
    #allocation10 [shape = 'u8[2048]{0}', space=smem, size = 0x800, scoped, tag = 'input window, operand 3, single buffered']
    #allocation11 [shape = 's32[1]{0}', space=sflag, size = 0x4, scoped, tag = 'scoped memory for tpu_custom_call.1']
    #allocation12 [shape = 'u8[2048]{0}', space=smem, size = 0x800, scoped, tag = 'input window, operand 4, single buffered']
    #allocation13 [shape = 's32[1]{0}', space=sflag, size = 0x4, scoped, tag = 'scoped memory for tpu_custom_call.1']
    #allocation14 [shape = 'u8[8192]{0}', space=vmem, size = 0x2000, scoped, tag = 'input window, operand 7']
    #allocation15 [shape = 'u8[8192]{0}', space=vmem, size = 0x2000, scoped, tag = 'output window, operand 0']
    #allocation16 [shape = 'u8[8192]{0}', space=vmem, size = 0x2000, scoped, tag = 'output window, operand 1']
    #allocation17 [shape = 's32[2]{0}', space=sflag, size = 0x8, scoped, tag = 'scoped memory for tpu_custom_call.1']
    #allocation18 [shape = 'u8[8192]{0}', space=vmem, size = 0x2000, scoped, tag = 'output window, operand 2']
    %22 = vsyncpa [#allocation7], 0
    %23 = vsyncpa [#allocation8], 0
    %24 = vsyncpa [#allocation11], 0
    %25 = vsyncpa [#allocation13], 0
    %26 = vsyncpa [#allocation5], 0
    %s27 = scalar_lea.sflag [#allocation5], 1
    %28 = vsyncpa %s27, 0
    %29 = vsyncpa [#allocation6], 0
    %s30 = scalar_lea.sflag [#allocation6], 1
    %31 = vsyncpa %s30, 0
    %32 = vsyncpa [#allocation17], 0
    %s33 = scalar_lea.sflag [#allocation17], 1
    %34 = vsyncpa %s33, 0
    loop: start=0, step=1, limit=4
    $region2: #{tpu_custom_call.1} parent=1 // loop_pre_header
      _
    $region3: #{tpu_custom_call.1} parent=1 // loop_header
      %s36 = sphi 0, %s40
      %p37 = scmp.ge.s32.totalorder %s36, 4
      %s44 = sphi 0, %s44
      %s46 = sphi 0, %s44
      %s47 = sphi 0, %s46
      %s61 = sphi 0, %s47
      %s65 = sphi 0, %s65
      %s67 = sphi 0, %s65
      %s68 = sphi 0, %s67
      %s82 = sphi 0, %s68
      %s86 = sphi 0, %s86
      %s88 = sphi 0, %s86
      %s89 = sphi 0, %s88
      %s103 = sphi 0, %s89
      %s107 = sphi 0, %s107
      %s109 = sphi 0, %s107
      %s110 = sphi 0, %s109
      %s124 = sphi 0, %s110
      %s130 = sphi 0, %s132
      %s133 = sphi 0, %s130
      %s134 = sphi 0, %s133
      %s150 = sphi 0, %s134
      %s156 = sphi 0, %s158
      %s159 = sphi 0, %s156
      %s160 = sphi 0, %s159
      %s176 = sphi 0, %s160
      %s182 = sphi 0, %s184
      %s185 = sphi 0, %s182
      %s186 = sphi 0, %s185
      %s202 = sphi 0, %s186
      %s208 = sphi 0, %s210
      %s211 = sphi 0, %s208
      %s212 = sphi 0, %s211
      %s228 = sphi 0, %s212
      %s234 = sphi 0, %s236
      %s237 = sphi 0, %s234
      %s238 = sphi 0, %s237
      %s254 = sphi 0, %s238
      %s260 = sphi 0, %s262
      %s263 = sphi 0, %s260
      %s264 = sphi 0, %s263
      %s280 = sphi 0, %s264
    $region4: #{tpu_custom_call.1} parent=1 // loop_header_branch
      %39 = sbr.rel (%p37) target = $region8
    $region5: #{tpu_custom_call.1} parent=1 // loop_body
      %s41 = ssub.s32 %s36, 1
      %s42 = ssub.s32 %s36, 2
      %s43 = sadd.s32 %s36, 1
      %s45 = sadd.s32 %s44, 1
      %p48 = scmp.eq.s32.totalorder %s36, 1
      %p49 = scmp.ne.s32.totalorder %s44, %s46
      %p50 = scmp.eq.s32.totalorder %s36, 0
      %p51 = por %p49, %p50
      %p52 = scmp.ne.s32.totalorder %s44, %s46
      %p53 = scmp.eq.s32.totalorder %s41, 1
      %p54 = por %p52, %p53
      %p55 = scmp.ne.s32.totalorder %s46, %s47
      %p56 = scmp.eq.s32.totalorder %s41, 0
      %p57 = por %p55, %p56
      %p58 = scmp.ne.s32.totalorder %s46, %s47
      %p59 = scmp.eq.s32.totalorder %s42, 1
      %p60 = por %p58, %p59
      %p62 = scmp.ne.s32.totalorder %s47, %s61
      %p63 = scmp.eq.s32.totalorder %s42, 0
      %p64 = por %p62, %p63
      %s66 = sadd.s32 %s65, 1
      %p69 = scmp.eq.s32.totalorder %s36, 1
      %p70 = scmp.ne.s32.totalorder %s65, %s67
      %p71 = scmp.eq.s32.totalorder %s36, 0
      %p72 = por %p70, %p71
      %p73 = scmp.ne.s32.totalorder %s65, %s67
      %p74 = scmp.eq.s32.totalorder %s41, 1
      %p75 = por %p73, %p74
      %p76 = scmp.ne.s32.totalorder %s67, %s68
      %p77 = scmp.eq.s32.totalorder %s41, 0
      %p78 = por %p76, %p77
      %p79 = scmp.ne.s32.totalorder %s67, %s68
      %p80 = scmp.eq.s32.totalorder %s42, 1
      %p81 = por %p79, %p80
      %p83 = scmp.ne.s32.totalorder %s68, %s82
      %p84 = scmp.eq.s32.totalorder %s42, 0
      %p85 = por %p83, %p84
      %s87 = sadd.s32 %s86, 1
      %p90 = scmp.eq.s32.totalorder %s36, 1
      %p91 = scmp.ne.s32.totalorder %s86, %s88
      %p92 = scmp.eq.s32.totalorder %s36, 0
      %p93 = por %p91, %p92
      %p94 = scmp.ne.s32.totalorder %s86, %s88
      %p95 = scmp.eq.s32.totalorder %s41, 1
      %p96 = por %p94, %p95
      %p97 = scmp.ne.s32.totalorder %s88, %s89
      %p98 = scmp.eq.s32.totalorder %s41, 0
      %p99 = por %p97, %p98
      %p100 = scmp.ne.s32.totalorder %s88, %s89
      %p101 = scmp.eq.s32.totalorder %s42, 1
      %p102 = por %p100, %p101
      %p104 = scmp.ne.s32.totalorder %s89, %s103
      %p105 = scmp.eq.s32.totalorder %s42, 0
      %p106 = por %p104, %p105
      %s108 = sadd.s32 %s107, 1
      %p111 = scmp.eq.s32.totalorder %s36, 1
      %p112 = scmp.ne.s32.totalorder %s107, %s109
      %p113 = scmp.eq.s32.totalorder %s36, 0
      %p114 = por %p112, %p113
      %p115 = scmp.ne.s32.totalorder %s107, %s109
      %p116 = scmp.eq.s32.totalorder %s41, 1
      %p117 = por %p115, %p116
      %p118 = scmp.ne.s32.totalorder %s109, %s110
      %p119 = scmp.eq.s32.totalorder %s41, 0
      %p120 = por %p118, %p119
      %p121 = scmp.ne.s32.totalorder %s109, %s110
      %p122 = scmp.eq.s32.totalorder %s42, 1
      %p123 = por %p121, %p122
      %p125 = scmp.ne.s32.totalorder %s110, %s124
      %p126 = scmp.eq.s32.totalorder %s42, 0
      %p127 = por %p125, %p126
      %s128 = ssub.s32 %s36, %s43
      %p129 = scmp.eq.s32.totalorder %s128, 0
      %s131 = sadd.s32 %s130, 1
      %s132 = scalar_select %p129, %s130, %s131
      %p135 = pneg %p129
      %p136 = scmp.eq.s32.totalorder %s36, 1
      %p137 = por %p135, %p136
      %p138 = scmp.ne.s32.totalorder %s130, %s133
      %p139 = scmp.eq.s32.totalorder %s36, 0
      %p140 = por %p138, %p139
      %p141 = scmp.ne.s32.totalorder %s130, %s133
      %p142 = scmp.eq.s32.totalorder %s41, 1
      %p143 = por %p141, %p142
      %p144 = scmp.ne.s32.totalorder %s133, %s134
      %p145 = scmp.eq.s32.totalorder %s41, 0
      %p146 = por %p144, %p145
      %p147 = scmp.ne.s32.totalorder %s133, %s134
      %p148 = scmp.eq.s32.totalorder %s42, 1
      %p149 = por %p147, %p148
      %p151 = scmp.ne.s32.totalorder %s134, %s150
      %p152 = scmp.eq.s32.totalorder %s42, 0
      %p153 = por %p151, %p152
      %s154 = ssub.s32 %s36, %s43
      %p155 = scmp.eq.s32.totalorder %s154, 0
      %s157 = sadd.s32 %s156, 1
      %s158 = scalar_select %p155, %s156, %s157
      %p161 = pneg %p155
      %p162 = scmp.eq.s32.totalorder %s36, 1
      %p163 = por %p161, %p162
      %p164 = scmp.ne.s32.totalorder %s156, %s159
      %p165 = scmp.eq.s32.totalorder %s36, 0
      %p166 = por %p164, %p165
      %p167 = scmp.ne.s32.totalorder %s156, %s159
      %p168 = scmp.eq.s32.totalorder %s41, 1
      %p169 = por %p167, %p168
      %p170 = scmp.ne.s32.totalorder %s159, %s160
      %p171 = scmp.eq.s32.totalorder %s41, 0
      %p172 = por %p170, %p171
      %p173 = scmp.ne.s32.totalorder %s159, %s160
      %p174 = scmp.eq.s32.totalorder %s42, 1
      %p175 = por %p173, %p174
      %p177 = scmp.ne.s32.totalorder %s160, %s176
      %p178 = scmp.eq.s32.totalorder %s42, 0
      %p179 = por %p177, %p178
      %s180 = ssub.s32 %s36, %s43
      %p181 = scmp.eq.s32.totalorder %s180, 0
      %s183 = sadd.s32 %s182, 1
      %s184 = scalar_select %p181, %s182, %s183
      %p187 = pneg %p181
      %p188 = scmp.eq.s32.totalorder %s36, 1
      %p189 = por %p187, %p188
      %p190 = scmp.ne.s32.totalorder %s182, %s185
      %p191 = scmp.eq.s32.totalorder %s36, 0
      %p192 = por %p190, %p191
      %p193 = scmp.ne.s32.totalorder %s182, %s185
      %p194 = scmp.eq.s32.totalorder %s41, 1
      %p195 = por %p193, %p194
      %p196 = scmp.ne.s32.totalorder %s185, %s186
      %p197 = scmp.eq.s32.totalorder %s41, 0
      %p198 = por %p196, %p197
      %p199 = scmp.ne.s32.totalorder %s185, %s186
      %p200 = scmp.eq.s32.totalorder %s42, 1
      %p201 = por %p199, %p200
      %p203 = scmp.ne.s32.totalorder %s186, %s202
      %p204 = scmp.eq.s32.totalorder %s42, 0
      %p205 = por %p203, %p204
      %s206 = ssub.s32 %s36, %s43
      %p207 = scmp.eq.s32.totalorder %s206, 0
      %s209 = sadd.s32 %s208, 1
      %s210 = scalar_select %p207, %s208, %s209
      %p213 = pneg %p207
      %p214 = scmp.eq.s32.totalorder %s36, 1
      %p215 = por %p213, %p214
      %p216 = scmp.ne.s32.totalorder %s208, %s211
      %p217 = scmp.eq.s32.totalorder %s36, 0
      %p218 = por %p216, %p217
      %p219 = scmp.ne.s32.totalorder %s208, %s211
      %p220 = scmp.eq.s32.totalorder %s41, 1
      %p221 = por %p219, %p220
      %p222 = scmp.ne.s32.totalorder %s211, %s212
      %p223 = scmp.eq.s32.totalorder %s41, 0
      %p224 = por %p222, %p223
      %p225 = scmp.ne.s32.totalorder %s211, %s212
      %p226 = scmp.eq.s32.totalorder %s42, 1
      %p227 = por %p225, %p226
      %p229 = scmp.ne.s32.totalorder %s212, %s228
      %p230 = scmp.eq.s32.totalorder %s42, 0
      %p231 = por %p229, %p230
      %s232 = ssub.s32 %s36, %s43
      %p233 = scmp.eq.s32.totalorder %s232, 0
      %s235 = sadd.s32 %s234, 1
      %s236 = scalar_select %p233, %s234, %s235
      %p239 = pneg %p233
      %p240 = scmp.eq.s32.totalorder %s36, 1
      %p241 = por %p239, %p240
      %p242 = scmp.ne.s32.totalorder %s234, %s237
      %p243 = scmp.eq.s32.totalorder %s36, 0
      %p244 = por %p242, %p243
      %p245 = scmp.ne.s32.totalorder %s234, %s237
      %p246 = scmp.eq.s32.totalorder %s41, 1
      %p247 = por %p245, %p246
      %p248 = scmp.ne.s32.totalorder %s237, %s238
      %p249 = scmp.eq.s32.totalorder %s41, 0
      %p250 = por %p248, %p249
      %p251 = scmp.ne.s32.totalorder %s237, %s238
      %p252 = scmp.eq.s32.totalorder %s42, 1
      %p253 = por %p251, %p252
      %p255 = scmp.ne.s32.totalorder %s238, %s254
      %p256 = scmp.eq.s32.totalorder %s42, 0
      %p257 = por %p255, %p256
      %s258 = ssub.s32 %s36, %s43
      %p259 = scmp.eq.s32.totalorder %s258, 0
      %s261 = sadd.s32 %s260, 1
      %s262 = scalar_select %p259, %s260, %s261
      %p265 = pneg %p259
      %p266 = scmp.eq.s32.totalorder %s36, 1
      %p267 = por %p265, %p266
      %p268 = scmp.ne.s32.totalorder %s260, %s263
      %p269 = scmp.eq.s32.totalorder %s36, 0
      %p270 = por %p268, %p269
      %p271 = scmp.ne.s32.totalorder %s260, %s263
      %p272 = scmp.eq.s32.totalorder %s41, 1
      %p273 = por %p271, %p272
      %p274 = scmp.ne.s32.totalorder %s263, %s264
      %p275 = scmp.eq.s32.totalorder %s41, 0
      %p276 = por %p274, %p275
      %p277 = scmp.ne.s32.totalorder %s263, %s264
      %p278 = scmp.eq.s32.totalorder %s42, 1
      %p279 = por %p277, %p278
      %p281 = scmp.ne.s32.totalorder %s264, %s280
      %p282 = scmp.eq.s32.totalorder %s42, 0
      %p283 = por %p281, %p282
      %p284 = scmp.le.s32.totalorder 1, %s36
      %p285 = scmp.lt.s32.totalorder %s36, 3
      %p286 = pnand %p284, %p285
      %p287 = pneg %p286
      // Predicated region
      $region9: #{tpu_custom_call.1} parent=5 // pred_check
        _
      $region10: #{tpu_custom_call.1} parent=5 // pred_check_branch
        %289 = sbr.rel (%p286) target = $region12
      $region11: #{tpu_custom_call.1} parent=5 // pred_region
        %s290 = ssub.s32 %s36, 1
        // Predicated region
        $region13: #{tpu_custom_call.1} parent=11 // pred_check
          %p291 = pneg %p57
        $region14: #{tpu_custom_call.1} parent=11 // pred_check_branch
          %293 = sbr.rel (%p291) target = $region16
        $region15: #{tpu_custom_call.1} parent=11 // pred_region
          %s295 = ssub.s32 64, 64
          %296 = vsyncadd [#allocation7], %s295
          %299 = dma.hbm_to_smem %s1, 64, [#allocation4], [#allocation7]
        $region16: #{tpu_custom_call.1} parent=11 // pred_fallthru
          _
        // Predicated region
        $region17: #{tpu_custom_call.1} parent=11 // pred_check
          %p300 = pneg %p78
        $region18: #{tpu_custom_call.1} parent=11 // pred_check_branch
          %302 = sbr.rel (%p300) target = $region20
        $region19: #{tpu_custom_call.1} parent=11 // pred_region
          %s304 = ssub.s32 64, 64
          %305 = vsyncadd [#allocation8], %s304
          %s307 = sshll.u32 %s2, 4
          %s308 = int_to_ptr.vmem [resolvable:$true] %s307
          %310 = dma.vmem_to_smem %s308, 64, [#allocation9], [#allocation8]
        $region20: #{tpu_custom_call.1} parent=11 // pred_fallthru
          _
        // Predicated region
        $region21: #{tpu_custom_call.1} parent=11 // pred_check
          %p311 = pneg %p99
        $region22: #{tpu_custom_call.1} parent=11 // pred_check_branch
          %313 = sbr.rel (%p311) target = $region24
        $region23: #{tpu_custom_call.1} parent=11 // pred_region
          %s315 = ssub.s32 64, 64
          %316 = vsyncadd [#allocation11], %s315
          %319 = dma.hbm_to_smem %s3, 64, [#allocation10], [#allocation11]
        $region24: #{tpu_custom_call.1} parent=11 // pred_fallthru
          _
        // Predicated region
        $region25: #{tpu_custom_call.1} parent=11 // pred_check
          %p320 = pneg %p120
        $region26: #{tpu_custom_call.1} parent=11 // pred_check_branch
          %322 = sbr.rel (%p320) target = $region28
        $region27: #{tpu_custom_call.1} parent=11 // pred_region
          %s324 = ssub.s32 64, 64
          %325 = vsyncadd [#allocation13], %s324
          %s327 = sshll.u32 %s4, 4
          %s328 = int_to_ptr.vmem [resolvable:$true] %s327
          %330 = dma.vmem_to_smem %s328, 64, [#allocation12], [#allocation13]
        $region28: #{tpu_custom_call.1} parent=11 // pred_fallthru
          _
      $region12: #{tpu_custom_call.1} parent=5 // pred_fallthru
        _
      %p331 = scmp.lt.s32.totalorder %s36, 2
      // Predicated region
      $region29: #{tpu_custom_call.1} parent=5 // pred_check
        %p332 = pneg %p331
      $region30: #{tpu_custom_call.1} parent=5 // pred_check_branch
        %334 = sbr.rel (%p332) target = $region32
      $region31: #{tpu_custom_call.1} parent=5 // pred_region
        // Predicated region
        $region33: #{tpu_custom_call.1} parent=31 // pred_check
          %p335 = pneg %p140
        $region34: #{tpu_custom_call.1} parent=31 // pred_check_branch
          %337 = sbr.rel (%p335) target = $region36
        $region35: #{tpu_custom_call.1} parent=31 // pred_region
          %p338 = scmp.lt.s32.totalorder %s36, 1
          %s339 = scalar_select %p338, %s36, 1
          %s340 = smul.addr %s339, 8
          %s341 = scalar_lea.vmem %s5, %s340
        $region36: #{tpu_custom_call.1} parent=31 // pred_fallthru
          _
        // Predicated region
        $region37: #{tpu_custom_call.1} parent=31 // pred_check
          %p342 = pneg %p166
        $region38: #{tpu_custom_call.1} parent=31 // pred_check_branch
          %344 = sbr.rel (%p342) target = $region40
        $region39: #{tpu_custom_call.1} parent=31 // pred_region
          %p345 = scmp.lt.s32.totalorder %s36, 1
          %s346 = scalar_select %p345, %s36, 1
          %s347 = smul.addr %s346, 8
          %s348 = scalar_lea.vmem %s6, %s347
        $region40: #{tpu_custom_call.1} parent=31 // pred_fallthru
          _
        // Predicated region
        $region41: #{tpu_custom_call.1} parent=31 // pred_check
          %p349 = pneg %p192
        $region42: #{tpu_custom_call.1} parent=31 // pred_check_branch
          %351 = sbr.rel (%p349) target = $region44
        $region43: #{tpu_custom_call.1} parent=31 // pred_region
          %s352 = sand.u32 %s182, 1
          %s353 = scalar_lea.sflag [#allocation5], %s352
          %s354 = sand.u32 %s182, 1
          %s355 = smul.addr %s354, 8
          %s356 = scalar_lea.vmem [#allocation14], %s355
          %s358 = ssub.s32 128, 128
          %359 = vsyncadd %s353, %s358
          %s360 = smul.addr %s36, 128
          %s361 = scalar_lea.hbm %s7, %s360
          %s363 = sshll.u32 %s356, 4
          %s364 = int_to_ptr.vmem [resolvable:$true] %s363
          %366 = dma.hbm_to_vmem [thread:$0]  %s361, 128, %s364, %s353
        $region44: #{tpu_custom_call.1} parent=31 // pred_fallthru
          _
      $region32: #{tpu_custom_call.1} parent=5 // pred_fallthru
        _
      %p367 = scmp.le.s32.totalorder 1, %s36
      %p368 = scmp.lt.s32.totalorder %s36, 3
      %p369 = pnand %p367, %p368
      %p370 = pneg %p369
      // Predicated region
      $region45: #{tpu_custom_call.1} parent=5 // pred_check
        _
      $region46: #{tpu_custom_call.1} parent=5 // pred_check_branch
        %372 = sbr.rel (%p369) target = $region48
      $region47: #{tpu_custom_call.1} parent=5 // pred_region
        %s373 = ssub.s32 %s36, 1
        // Predicated region
        $region49: #{tpu_custom_call.1} parent=47 // pred_check
          %p374 = pneg %p57
        $region50: #{tpu_custom_call.1} parent=47 // pred_check_branch
          %376 = sbr.rel (%p374) target = $region52
        $region51: #{tpu_custom_call.1} parent=47 // pred_region
          %377 = dma.done [#allocation7], 64
        $region52: #{tpu_custom_call.1} parent=47 // pred_fallthru
          _
        // Predicated region
        $region53: #{tpu_custom_call.1} parent=47 // pred_check
          %p378 = pneg %p78
        $region54: #{tpu_custom_call.1} parent=47 // pred_check_branch
          %380 = sbr.rel (%p378) target = $region56
        $region55: #{tpu_custom_call.1} parent=47 // pred_region
          %381 = dma.done [#allocation8], 64
        $region56: #{tpu_custom_call.1} parent=47 // pred_fallthru
          _
        // Predicated region
        $region57: #{tpu_custom_call.1} parent=47 // pred_check
          %p382 = pneg %p99
        $region58: #{tpu_custom_call.1} parent=47 // pred_check_branch
          %384 = sbr.rel (%p382) target = $region60
        $region59: #{tpu_custom_call.1} parent=47 // pred_region
          %385 = dma.done [#allocation11], 64
        $region60: #{tpu_custom_call.1} parent=47 // pred_fallthru
          _
        // Predicated region
        $region61: #{tpu_custom_call.1} parent=47 // pred_check
          %p386 = pneg %p120
        $region62: #{tpu_custom_call.1} parent=47 // pred_check_branch
          %388 = sbr.rel (%p386) target = $region64
        $region63: #{tpu_custom_call.1} parent=47 // pred_region
          %389 = dma.done [#allocation13], 64
        $region64: #{tpu_custom_call.1} parent=47 // pred_fallthru
          _
        %s390 = sand.u32 %s185, 1
        %s391 = scalar_lea.sflag [#allocation5], %s390
        %s392 = sand.u32 %s185, 1
        %s393 = smul.addr %s392, 8
        %s394 = scalar_lea.vmem [#allocation14], %s393
        // Predicated region
        $region65: #{tpu_custom_call.1} parent=47 // pred_check
          %p395 = pneg %p198
        $region66: #{tpu_custom_call.1} parent=47 // pred_check_branch
          %397 = sbr.rel (%p395) target = $region68
        $region67: #{tpu_custom_call.1} parent=47 // pred_region
          %398 = dma.done %s391, 128
        $region68: #{tpu_custom_call.1} parent=47 // pred_fallthru
          _
        %399 = sfence
        %p400 = pneg %p57
        %p401 = pneg %p54
        %p402 = pneg %p78
        %p403 = pneg %p75
        %p404 = pneg %p99
        %p405 = pneg %p96
        %p406 = pneg %p120
        %p407 = pneg %p117
        %p408 = scmp.lt.s32.totalorder %s41, 1
        %s409 = scalar_select %p408, %s41, 1
        %s410 = smul.addr %s409, 8
        %s411 = scalar_lea.vmem %s5, %s410
        %p412 = pneg %p146
        %p413 = pneg %p143
        %p414 = scmp.lt.s32.totalorder %s41, 1
        %s415 = scalar_select %p414, %s41, 1
        %s416 = smul.addr %s415, 8
        %s417 = scalar_lea.vmem %s6, %s416
        %p418 = pneg %p172
        %p419 = pneg %p169
        %s420 = sand.u32 %s185, 1
        %s421 = scalar_lea.sflag [#allocation5], %s420
        %s422 = sand.u32 %s185, 1
        %s423 = smul.addr %s422, 8
        %s424 = scalar_lea.vmem [#allocation14], %s423
        %p425 = pneg %p198
        %p426 = pneg %p195
        %p427 = pneg %p224
        %p428 = pneg %p221
        %s429 = sand.u32 %s211, 1
        %s430 = scalar_lea.sflag [#allocation6], %s429
        %s431 = sand.u32 %s211, 1
        %s432 = smul.addr %s431, 8
        %s433 = scalar_lea.vmem [#allocation15], %s432
        %p434 = pneg %p250
        %p435 = pneg %p247
        %s436 = sand.u32 %s41, 1
        %s437 = scalar_lea.sflag [#allocation17], %s436
        %s438 = sand.u32 %s237, 1
        %s439 = smul.addr %s438, 8
        %s440 = scalar_lea.vmem [#allocation16], %s439
        %p441 = pneg %p276
        %p442 = pneg %p273
        %s443 = sand.u32 %s41, 1
        %s444 = scalar_lea.sflag [#allocation17], %s443
        %s445 = sand.u32 %s263, 1
        %s446 = smul.addr %s445, 8
        %s447 = scalar_lea.vmem [#allocation18], %s446
        %p448 = scmp.lt.s32.totalorder %s41, 1
        %s449 = scalar_select %p448, %s41, 1
        %s450 = smul.addr %s449, 8
        %s451 = scalar_lea.vmem %s5, %s450
        %p452 = scmp.lt.s32.totalorder %s41, 1
        %s453 = scalar_select %p452, %s41, 1
        %s454 = smul.addr %s453, 8
        %s455 = scalar_lea.vmem %s6, %s454
        %s456 = smul.u32 %s41, 1024
        %s457 = sadd.s32 %s456, 1024
        %v458 = vld [vmem:[%s451] sm:$0xff]
        %v459 = vld [vmem:[%s455] sm:$0xff]
        %v460 = vld [vmem:[%s394] sm:$0xff]
        %461 = vst [vmem:[%s433] sm:$0xff] 0.0
        %462 = vst [vmem:[%s440] sm:$0xff] 0.0
        %463 = vst [vmem:[%s447] sm:$0xff] 0.0
        %v464 = vlaneseq
        %v465 = vshrl.u32 %v464, 7
        %v466 = vlaneseq
        %v467 = vand.u32 %v466, 127
        %v468 = vmul.u32 %v465, 128
        %v469 = vstv %s456
        %v470 = vadd.s32 %v469, %v468
        %v471 = vadd.s32 %v470, %v467
        %s472 = sld [smem:[#allocation3]]
        %s473 = sld [smem:[#allocation3 + $0x1]]
        %p474 = scmp.lt.s32.totalorder %s472, %s457
        %p475 = scmp.gt.s32.totalorder %s473, %s456
        %p476 = pnand %p474, %p475
        %p477 = pneg %p476
        // Predicated region
        $region69: #{tpu_custom_call.1} parent=47 // pred_check
          _
        $region70: #{tpu_custom_call.1} parent=47 // pred_check_branch
          %479 = sbr.rel (%p476) target = $region72
        $region71: #{tpu_custom_call.1} parent=47 // pred_region
          %s480 = sld [smem:[#allocation4]]
          %s481 = sld [smem:[#allocation4 + $0x1]]
          %s482 = sld [smem:[#allocation4 + $0x2]]
          %s483 = sld [smem:[#allocation4 + $0x3]]
          %s484 = sld [smem:[#allocation9]]
          %s485 = sld [smem:[#allocation9 + $0x1]]
          %s486 = sld [smem:[#allocation10]]
          %s487 = sld [smem:[#allocation10 + $0x1]]
          %s488 = sld [smem:[#allocation10 + $0x2]]
          %s489 = sld [smem:[#allocation12]]
          %v490 = vstv %s480
          %v491 = vmul.f32 %v490, %v458
          %v492 = vstv %s481
          %v493 = vmul.f32 %v492, %v459
          %v494 = vadd.f32 %v491, %v493
          %v495 = vstv %s484
          %v496 = vadd.f32 %v494, %v495
          %v497 = vstv %s482
          %v498 = vmul.f32 %v497, %v458
          %v499 = vstv %s483
          %v500 = vmul.f32 %v499, %v459
          %v501 = vadd.f32 %v498, %v500
          %v502 = vstv %s485
          %v503 = vadd.f32 %v501, %v502
          %v504 = vmul.f32 %v496, %v496
          %v505 = vmul.f32 %v503, %v503
          %v506 = vadd.f32 %v504, %v505
          %v507 = vadd.f32 %v506, 1e-06
          %v508 = vrcp.pop %v507
          %v509 = vstv %s486
          %v510 = vmul.f32 %v509, %v496
          %v511 = vand.u32 2147483647, %v496
          %vm512 = vcmp.le.f32.partialorder %v511, 0.7853982
          %vm513 = vcmp.lt.s32.totalorder %v496, 0
          %v514 = vand.u32 %v496, 2139095040
          %v515 = vshrl.u32 %v514, 23
          %v516 = vsub.s32 %v515, 127
          %v517 = vand.u32 2147483647, %v496
          %v518 = vand.u32 %v517, 8388607
          %v519 = vor.u32 %v518, 8388608
          %v520 = vsub.s32 0, %v519
          %v521 = vadd.s32 %v516, 1
          %vm522 = vcmp.gt.s32.totalorder %v521, 0
          %v523 = vsel %vm522, %v521, 0
          %v524 = vshrl.u32 %v523, 5
          %v525 = vand.u32 %v523, 31
          %v526 = vsub.s32 32, %v525
          %v527 = vshrl.u32 683565275, %v526
          %v528 = vshll.u32 683565275, %v525
          %v529 = vshrl.u32 2475754826, %v526
          %v530 = vor.u32 %v528, %v529
          %v531 = vshll.u32 2475754826, %v525
          %v532 = vshrl.u32 2131351028, %v526
          %v533 = vor.u32 %v531, %v532
          %v534 = vshll.u32 2131351028, %v525
          %v535 = vshrl.u32 2102212464, %v526
          %v536 = vor.u32 %v534, %v535
          %v537 = vshll.u32 2102212464, %v525
          %v538 = vshrl.u32 920167782, %v526
          %v539 = vor.u32 %v537, %v538
          %v540 = vshll.u32 920167782, %v525
          %v541 = vshrl.u32 1326507024, %v526
          %v542 = vor.u32 %v540, %v541
          %vm543 = vcmp.lt.s32.totalorder %v524, 1
          %vm544 = vcmp.lt.s32.totalorder %v524, 2
          %vm545 = vcmp.lt.s32.totalorder %v524, 3
          %vm546 = vcmp.lt.s32.totalorder %v524, 4
          %v547 = vsel %vm543, %v527, %v530
          %v548 = vsel %vm546, %v536, 2102212464
          %v549 = vsel %vm545, %v533, %v548
          %v550 = vsel %vm544, %v547, %v549
          %v551 = vsel %vm543, %v530, %v533
          %v552 = vsel %vm546, %v539, 920167782
          %v553 = vsel %vm545, %v536, %v552
          %v554 = vsel %vm544, %v551, %v553
          %v555 = vsel %vm543, %v533, %v536
          %v556 = vsel %vm546, %v542, 1326507024
          %v557 = vsel %vm545, %v539, %v556
          %v558 = vsel %vm544, %v555, %v557
          %v559 = vshll.u32 %v519, 8
          %v560 = vmul.u32.u64.compose %v559, %v558
          %v561 = vextract.low.u32 %v560
          %v562 = vextract.high.u32 %v560
          %v563 = vmul.u32.u64.compose %v559, %v554
          %v564 = vextract.low.u32 %v563
          %v565 = vextract.high.u32 %v563
          %v566 = vmul.u32 %v559, %v550
          %v567 = vadd.s32 %v562, %v564
          %vm568 = vc.u32 %v562, %v564
          %v569 = vadd.s32 %v565, 1
          %v570 = vsel %vm568, %v569, %v565
          %v571 = vadd.s32 %v566, %v570
          %v572 = vadd.s32 %v571, 536870912
          %v573 = vshrl.u32 %v572, 30
          %v574 = vshll.u32 %v573, 30
          %v575 = vsub.s32 %v571, %v574
          %vm576 = vcmp.lt.s32.totalorder %v575, 0
          %v577 = vsub.s32 0, %v575
          %v578 = vsel %vm576, %v577, %v575
          %v579 = vclz %v578
          %v580 = vsub.s32 %v579, 2
          %vm581 = vcmp.gt.s32.totalorder 0, %v580
          %v582 = vsel %vm581, 0, %v580
          %v583 = vsub.s32 32, %v582
          %v584 = vshll.u32 %v575, %v582
          %v585 = vshrl.u32 %v567, %v583
          %v586 = vor.u32 %v584, %v585
          %v587 = vsub.s32 4294967266, %v582
          %v588 = vadd.s32 %v587, 127
          %v589 = vshll.u32 %v588, 23
          %v590 = vor.u32 4788187, %v589
          %v591 = vand.u32 2147483647, %v590
          %v593 = vcvt.s32.f32 %v586
          %v594 = vmul.f32 %v593, %v591
          %v595 = vxor.u32 %v594, 2147483648
          %v596 = vsel %vm513, %v595, %v594
          %v597 = vsub.s32 4, %v573
          %v598 = vsel %vm513, %v597, %v573
          %v599 = vsel %vm512, %v496, %v596
          %v600 = vsel %vm512, 0, %v598
          %v601 = vcosq.f32.pop %v599
          %v602 = vsinq.f32.pop %v599
          %vm603 = vweird.f32 %v496
          %v604 = vadd.s32 %v600, 3
          %v605 = vand.u32 %v604, 3
          %vm606 = vcmp.lt.s32.totalorder %v605, 2
          %vm607 = vcmp.eq.s32.totalorder %v605, 0
          %v608 = vxor.u32 %v602, 2147483648
          %v609 = vsel %vm607, %v601, %v608
          %vm610 = vcmp.eq.s32.totalorder %v605, 2
          %v611 = vxor.u32 %v601, 2147483648
          %v612 = vsel %vm610, %v611, %v602
          %v613 = vsel %vm606, %v609, %v612
          %v614 = vsel %vm603, nan, %v613
          %v615 = vstv %s487
          %v616 = vmul.f32 %v615, %v614
          %v617 = vadd.f32 %v510, %v616
          %v618 = vmul.f32 %v496, %v508
          %v619 = vstv %s488
          %v620 = vmul.f32 %v619, %v618
          %v621 = vadd.f32 %v617, %v620
          %v622 = vmul.f32 %v509, %v503
          %v623 = vand.u32 2147483647, %v503
          %vm624 = vcmp.le.f32.partialorder %v623, 0.7853982
          %vm625 = vcmp.lt.s32.totalorder %v503, 0
          %v626 = vand.u32 %v503, 2139095040
          %v627 = vshrl.u32 %v626, 23
          %v628 = vsub.s32 %v627, 127
          %v629 = vand.u32 2147483647, %v503
          %v630 = vand.u32 %v629, 8388607
          %v631 = vor.u32 %v630, 8388608
          %v632 = vsub.s32 0, %v631
          %v633 = vadd.s32 %v628, 1
          %vm634 = vcmp.gt.s32.totalorder %v633, 0
          %v635 = vsel %vm634, %v633, 0
          %v636 = vshrl.u32 %v635, 5
          %v637 = vand.u32 %v635, 31
          %v638 = vsub.s32 32, %v637
          %v639 = vshrl.u32 683565275, %v638
          %v640 = vshll.u32 683565275, %v637
          %v641 = vshrl.u32 2475754826, %v638
          %v642 = vor.u32 %v640, %v641
          %v643 = vshll.u32 2475754826, %v637
          %v644 = vshrl.u32 2131351028, %v638
          %v645 = vor.u32 %v643, %v644
          %v646 = vshll.u32 2131351028, %v637
          %v647 = vshrl.u32 2102212464, %v638
          %v648 = vor.u32 %v646, %v647
          %v649 = vshll.u32 2102212464, %v637
          %v650 = vshrl.u32 920167782, %v638
          %v651 = vor.u32 %v649, %v650
          %v652 = vshll.u32 920167782, %v637
          %v653 = vshrl.u32 1326507024, %v638
          %v654 = vor.u32 %v652, %v653
          %vm655 = vcmp.lt.s32.totalorder %v636, 1
          %vm656 = vcmp.lt.s32.totalorder %v636, 2
          %vm657 = vcmp.lt.s32.totalorder %v636, 3
          %vm658 = vcmp.lt.s32.totalorder %v636, 4
          %v659 = vsel %vm655, %v639, %v642
          %v660 = vsel %vm658, %v648, 2102212464
          %v661 = vsel %vm657, %v645, %v660
          %v662 = vsel %vm656, %v659, %v661
          %v663 = vsel %vm655, %v642, %v645
          %v664 = vsel %vm658, %v651, 920167782
          %v665 = vsel %vm657, %v648, %v664
          %v666 = vsel %vm656, %v663, %v665
          %v667 = vsel %vm655, %v645, %v648
          %v668 = vsel %vm658, %v654, 1326507024
          %v669 = vsel %vm657, %v651, %v668
          %v670 = vsel %vm656, %v667, %v669
          %v671 = vshll.u32 %v631, 8
          %v672 = vmul.u32.u64.compose %v671, %v670
          %v673 = vextract.low.u32 %v672
          %v674 = vextract.high.u32 %v672
          %v675 = vmul.u32.u64.compose %v671, %v666
          %v676 = vextract.low.u32 %v675
          %v677 = vextract.high.u32 %v675
          %v678 = vmul.u32 %v671, %v662
          %v679 = vadd.s32 %v674, %v676
          %vm680 = vc.u32 %v674, %v676
          %v681 = vadd.s32 %v677, 1
          %v682 = vsel %vm680, %v681, %v677
          %v683 = vadd.s32 %v678, %v682
          %v684 = vadd.s32 %v683, 536870912
          %v685 = vshrl.u32 %v684, 30
          %v686 = vshll.u32 %v685, 30
          %v687 = vsub.s32 %v683, %v686
          %vm688 = vcmp.lt.s32.totalorder %v687, 0
          %v689 = vsub.s32 0, %v687
          %v690 = vsel %vm688, %v689, %v687
          %v691 = vclz %v690
          %v692 = vsub.s32 %v691, 2
          %vm693 = vcmp.gt.s32.totalorder 0, %v692
          %v694 = vsel %vm693, 0, %v692
          %v695 = vsub.s32 32, %v694
          %v696 = vshll.u32 %v687, %v694
          %v697 = vshrl.u32 %v679, %v695
          %v698 = vor.u32 %v696, %v697
          %v699 = vsub.s32 4294967266, %v694
          %v700 = vadd.s32 %v699, 127
          %v701 = vshll.u32 %v700, 23
          %v702 = vor.u32 4788187, %v701
          %v703 = vand.u32 2147483647, %v702
          %v705 = vcvt.s32.f32 %v698
          %v706 = vmul.f32 %v705, %v703
          %v707 = vxor.u32 %v706, 2147483648
          %v708 = vsel %vm625, %v707, %v706
          %v709 = vsub.s32 4, %v685
          %v710 = vsel %vm625, %v709, %v685
          %v711 = vsel %vm624, %v503, %v708
          %v712 = vsel %vm624, 0, %v710
          %v713 = vcosq.f32.pop %v711
          %v714 = vsinq.f32.pop %v711
          %vm715 = vweird.f32 %v503
          %v716 = vadd.s32 %v712, 3
          %v717 = vand.u32 %v716, 3
          %vm718 = vcmp.lt.s32.totalorder %v717, 2
          %vm719 = vcmp.eq.s32.totalorder %v717, 0
          %v720 = vxor.u32 %v714, 2147483648
          %v721 = vsel %vm719, %v713, %v720
          %vm722 = vcmp.eq.s32.totalorder %v717, 2
          %v723 = vxor.u32 %v713, 2147483648
          %v724 = vsel %vm722, %v723, %v714
          %v725 = vsel %vm718, %v721, %v724
          %v726 = vsel %vm715, nan, %v725
          %v727 = vmul.f32 %v615, %v726
          %v728 = vadd.f32 %v622, %v727
          %v729 = vmul.f32 %v503, %v508
          %v730 = vmul.f32 %v619, %v729
          %v731 = vadd.f32 %v728, %v730
          %v732 = vstv %s489
          %v733 = vadd.f32 %v460, %v732
          %v734 = vmul.f32 %v733, 0.5
          %p735 = scmp.le.s32.totalorder %s472, %s456
          %p736 = scmp.ge.s32.totalorder %s473, %s457
          %p737 = pnand %p735, %p736
          %p738 = pneg %p737
          // Predicated region
          $region73: #{tpu_custom_call.1} parent=71 // pred_check
            _
          $region74: #{tpu_custom_call.1} parent=71 // pred_check_branch
            %740 = sbr.rel (%p737) target = $region76
          $region75: #{tpu_custom_call.1} parent=71 // pred_region
            %741 = vst [vmem:[%s433] sm:$0xff] %v621
            %742 = vst [vmem:[%s440] sm:$0xff] %v731
            %743 = vst [vmem:[%s447] sm:$0xff] %v734
          $region76: #{tpu_custom_call.1} parent=71 // pred_fallthru
            _
          %p744 = pneg %p738
          // Predicated region
          $region77: #{tpu_custom_call.1} parent=71 // pred_check
            _
          $region78: #{tpu_custom_call.1} parent=71 // pred_check_branch
            %746 = sbr.rel (%p738) target = $region80
          $region79: #{tpu_custom_call.1} parent=71 // pred_region
            %v747 = vstv %s472
            %vm748 = vcmp.ge.s32.totalorder %v471, %v747
            %v749 = vstv %s473
            %vm750 = vcmp.lt.s32.totalorder %v471, %v749
            %vm751 = vmand %vm748, %vm750
            %v752 = vld [vmem:[%s433] sm:$0xff]
            %v753 = vsel %vm751, %v621, %v752
            %754 = vst [vmem:[%s433] sm:$0xff] %v753
            %v755 = vld [vmem:[%s440] sm:$0xff]
            %v756 = vsel %vm751, %v731, %v755
            %757 = vst [vmem:[%s440] sm:$0xff] %v756
            %v758 = vld [vmem:[%s447] sm:$0xff]
            %v759 = vsel %vm751, %v734, %v758
            %760 = vst [vmem:[%s447] sm:$0xff] %v759
          $region80: #{tpu_custom_call.1} parent=71 // pred_fallthru
            _
        $region72: #{tpu_custom_call.1} parent=47 // pred_fallthru
          _
        %s761 = sld [smem:[#allocation3 + $0x1]]
        %s762 = sld [smem:[#allocation3 + $0x2]]
        %p763 = scmp.lt.s32.totalorder %s761, %s457
        %p764 = scmp.gt.s32.totalorder %s762, %s456
        %p765 = pnand %p763, %p764
        %p766 = pneg %p765
        // Predicated region
        $region81: #{tpu_custom_call.1} parent=47 // pred_check
          _
        $region82: #{tpu_custom_call.1} parent=47 // pred_check_branch
          %768 = sbr.rel (%p765) target = $region84
        $region83: #{tpu_custom_call.1} parent=47 // pred_region
          %s769 = sld [smem:[#allocation4 + $0x80]]
          %s770 = sld [smem:[#allocation4 + $0x81]]
          %s771 = sld [smem:[#allocation4 + $0x82]]
          %s772 = sld [smem:[#allocation4 + $0x83]]
          %s773 = sld [smem:[#allocation9 + $0x80]]
          %s774 = sld [smem:[#allocation9 + $0x81]]
          %s775 = sld [smem:[#allocation10 + $0x80]]
          %s776 = sld [smem:[#allocation10 + $0x81]]
          %s777 = sld [smem:[#allocation10 + $0x82]]
          %s778 = sld [smem:[#allocation12 + $0x80]]
          %v779 = vstv %s769
          %v780 = vmul.f32 %v779, %v458
          %v781 = vstv %s770
          %v782 = vmul.f32 %v781, %v459
          %v783 = vadd.f32 %v780, %v782
          %v784 = vstv %s773
          %v785 = vadd.f32 %v783, %v784
          %v786 = vstv %s771
          %v787 = vmul.f32 %v786, %v458
          %v788 = vstv %s772
          %v789 = vmul.f32 %v788, %v459
          %v790 = vadd.f32 %v787, %v789
          %v791 = vstv %s774
          %v792 = vadd.f32 %v790, %v791
          %v793 = vmul.f32 %v785, %v785
          %v794 = vmul.f32 %v792, %v792
          %v795 = vadd.f32 %v793, %v794
          %v796 = vadd.f32 %v795, 1e-06
          %v797 = vrcp.pop %v796
          %v798 = vstv %s775
          %v799 = vmul.f32 %v798, %v785
          %v800 = vand.u32 2147483647, %v785
          %vm801 = vcmp.le.f32.partialorder %v800, 0.7853982
          %vm802 = vcmp.lt.s32.totalorder %v785, 0
          %v803 = vand.u32 %v785, 2139095040
          %v804 = vshrl.u32 %v803, 23
          %v805 = vsub.s32 %v804, 127
          %v806 = vand.u32 2147483647, %v785
          %v807 = vand.u32 %v806, 8388607
          %v808 = vor.u32 %v807, 8388608
          %v809 = vsub.s32 0, %v808
          %v810 = vadd.s32 %v805, 1
          %vm811 = vcmp.gt.s32.totalorder %v810, 0
          %v812 = vsel %vm811, %v810, 0
          %v813 = vshrl.u32 %v812, 5
          %v814 = vand.u32 %v812, 31
          %v815 = vsub.s32 32, %v814
          %v816 = vshrl.u32 683565275, %v815
          %v817 = vshll.u32 683565275, %v814
          %v818 = vshrl.u32 2475754826, %v815
          %v819 = vor.u32 %v817, %v818
          %v820 = vshll.u32 2475754826, %v814
          %v821 = vshrl.u32 2131351028, %v815
          %v822 = vor.u32 %v820, %v821
          %v823 = vshll.u32 2131351028, %v814
          %v824 = vshrl.u32 2102212464, %v815
          %v825 = vor.u32 %v823, %v824
          %v826 = vshll.u32 2102212464, %v814
          %v827 = vshrl.u32 920167782, %v815
          %v828 = vor.u32 %v826, %v827
          %v829 = vshll.u32 920167782, %v814
          %v830 = vshrl.u32 1326507024, %v815
          %v831 = vor.u32 %v829, %v830
          %vm832 = vcmp.lt.s32.totalorder %v813, 1
          %vm833 = vcmp.lt.s32.totalorder %v813, 2
          %vm834 = vcmp.lt.s32.totalorder %v813, 3
          %vm835 = vcmp.lt.s32.totalorder %v813, 4
          %v836 = vsel %vm832, %v816, %v819
          %v837 = vsel %vm835, %v825, 2102212464
          %v838 = vsel %vm834, %v822, %v837
          %v839 = vsel %vm833, %v836, %v838
          %v840 = vsel %vm832, %v819, %v822
          %v841 = vsel %vm835, %v828, 920167782
          %v842 = vsel %vm834, %v825, %v841
          %v843 = vsel %vm833, %v840, %v842
          %v844 = vsel %vm832, %v822, %v825
          %v845 = vsel %vm835, %v831, 1326507024
          %v846 = vsel %vm834, %v828, %v845
          %v847 = vsel %vm833, %v844, %v846
          %v848 = vshll.u32 %v808, 8
          %v849 = vmul.u32.u64.compose %v848, %v847
          %v850 = vextract.low.u32 %v849
          %v851 = vextract.high.u32 %v849
          %v852 = vmul.u32.u64.compose %v848, %v843
          %v853 = vextract.low.u32 %v852
          %v854 = vextract.high.u32 %v852
          %v855 = vmul.u32 %v848, %v839
          %v856 = vadd.s32 %v851, %v853
          %vm857 = vc.u32 %v851, %v853
          %v858 = vadd.s32 %v854, 1
          %v859 = vsel %vm857, %v858, %v854
          %v860 = vadd.s32 %v855, %v859
          %v861 = vadd.s32 %v860, 536870912
          %v862 = vshrl.u32 %v861, 30
          %v863 = vshll.u32 %v862, 30
          %v864 = vsub.s32 %v860, %v863
          %vm865 = vcmp.lt.s32.totalorder %v864, 0
          %v866 = vsub.s32 0, %v864
          %v867 = vsel %vm865, %v866, %v864
          %v868 = vclz %v867
          %v869 = vsub.s32 %v868, 2
          %vm870 = vcmp.gt.s32.totalorder 0, %v869
          %v871 = vsel %vm870, 0, %v869
          %v872 = vsub.s32 32, %v871
          %v873 = vshll.u32 %v864, %v871
          %v874 = vshrl.u32 %v856, %v872
          %v875 = vor.u32 %v873, %v874
          %v876 = vsub.s32 4294967266, %v871
          %v877 = vadd.s32 %v876, 127
          %v878 = vshll.u32 %v877, 23
          %v879 = vor.u32 4788187, %v878
          %v880 = vand.u32 2147483647, %v879
          %v882 = vcvt.s32.f32 %v875
          %v883 = vmul.f32 %v882, %v880
          %v884 = vxor.u32 %v883, 2147483648
          %v885 = vsel %vm802, %v884, %v883
          %v886 = vsub.s32 4, %v862
          %v887 = vsel %vm802, %v886, %v862
          %v888 = vsel %vm801, %v785, %v885
          %v889 = vsel %vm801, 0, %v887
          %v890 = vcosq.f32.pop %v888
          %v891 = vsinq.f32.pop %v888
          %vm892 = vweird.f32 %v785
          %v893 = vadd.s32 %v889, 3
          %v894 = vand.u32 %v893, 3
          %vm895 = vcmp.lt.s32.totalorder %v894, 2
          %vm896 = vcmp.eq.s32.totalorder %v894, 0
          %v897 = vxor.u32 %v891, 2147483648
          %v898 = vsel %vm896, %v890, %v897
          %vm899 = vcmp.eq.s32.totalorder %v894, 2
          %v900 = vxor.u32 %v890, 2147483648
          %v901 = vsel %vm899, %v900, %v891
          %v902 = vsel %vm895, %v898, %v901
          %v903 = vsel %vm892, nan, %v902
          %v904 = vstv %s776
          %v905 = vmul.f32 %v904, %v903
          %v906 = vadd.f32 %v799, %v905
          %v907 = vmul.f32 %v785, %v797
          %v908 = vstv %s777
          %v909 = vmul.f32 %v908, %v907
          %v910 = vadd.f32 %v906, %v909
          %v911 = vmul.f32 %v798, %v792
          %v912 = vand.u32 2147483647, %v792
          %vm913 = vcmp.le.f32.partialorder %v912, 0.7853982
          %vm914 = vcmp.lt.s32.totalorder %v792, 0
          %v915 = vand.u32 %v792, 2139095040
          %v916 = vshrl.u32 %v915, 23
          %v917 = vsub.s32 %v916, 127
          %v918 = vand.u32 2147483647, %v792
          %v919 = vand.u32 %v918, 8388607
          %v920 = vor.u32 %v919, 8388608
          %v921 = vsub.s32 0, %v920
          %v922 = vadd.s32 %v917, 1
          %vm923 = vcmp.gt.s32.totalorder %v922, 0
          %v924 = vsel %vm923, %v922, 0
          %v925 = vshrl.u32 %v924, 5
          %v926 = vand.u32 %v924, 31
          %v927 = vsub.s32 32, %v926
          %v928 = vshrl.u32 683565275, %v927
          %v929 = vshll.u32 683565275, %v926
          %v930 = vshrl.u32 2475754826, %v927
          %v931 = vor.u32 %v929, %v930
          %v932 = vshll.u32 2475754826, %v926
          %v933 = vshrl.u32 2131351028, %v927
          %v934 = vor.u32 %v932, %v933
          %v935 = vshll.u32 2131351028, %v926
          %v936 = vshrl.u32 2102212464, %v927
          %v937 = vor.u32 %v935, %v936
          %v938 = vshll.u32 2102212464, %v926
          %v939 = vshrl.u32 920167782, %v927
          %v940 = vor.u32 %v938, %v939
          %v941 = vshll.u32 920167782, %v926
          %v942 = vshrl.u32 1326507024, %v927
          %v943 = vor.u32 %v941, %v942
          %vm944 = vcmp.lt.s32.totalorder %v925, 1
          %vm945 = vcmp.lt.s32.totalorder %v925, 2
          %vm946 = vcmp.lt.s32.totalorder %v925, 3
          %vm947 = vcmp.lt.s32.totalorder %v925, 4
          %v948 = vsel %vm944, %v928, %v931
          %v949 = vsel %vm947, %v937, 2102212464
          %v950 = vsel %vm946, %v934, %v949
          %v951 = vsel %vm945, %v948, %v950
          %v952 = vsel %vm944, %v931, %v934
          %v953 = vsel %vm947, %v940, 920167782
          %v954 = vsel %vm946, %v937, %v953
          %v955 = vsel %vm945, %v952, %v954
          %v956 = vsel %vm944, %v934, %v937
          %v957 = vsel %vm947, %v943, 1326507024
          %v958 = vsel %vm946, %v940, %v957
          %v959 = vsel %vm945, %v956, %v958
          %v960 = vshll.u32 %v920, 8
          %v961 = vmul.u32.u64.compose %v960, %v959
          %v962 = vextract.low.u32 %v961
          %v963 = vextract.high.u32 %v961
          %v964 = vmul.u32.u64.compose %v960, %v955
          %v965 = vextract.low.u32 %v964
          %v966 = vextract.high.u32 %v964
          %v967 = vmul.u32 %v960, %v951
          %v968 = vadd.s32 %v963, %v965
          %vm969 = vc.u32 %v963, %v965
          %v970 = vadd.s32 %v966, 1
          %v971 = vsel %vm969, %v970, %v966
          %v972 = vadd.s32 %v967, %v971
          %v973 = vadd.s32 %v972, 536870912
          %v974 = vshrl.u32 %v973, 30
          %v975 = vshll.u32 %v974, 30
          %v976 = vsub.s32 %v972, %v975
          %vm977 = vcmp.lt.s32.totalorder %v976, 0
          %v978 = vsub.s32 0, %v976
          %v979 = vsel %vm977, %v978, %v976
          %v980 = vclz %v979
          %v981 = vsub.s32 %v980, 2
          %vm982 = vcmp.gt.s32.totalorder 0, %v981
          %v983 = vsel %vm982, 0, %v981
          %v984 = vsub.s32 32, %v983
          %v985 = vshll.u32 %v976, %v983
          %v986 = vshrl.u32 %v968, %v984
          %v987 = vor.u32 %v985, %v986
          %v988 = vsub.s32 4294967266, %v983
          %v989 = vadd.s32 %v988, 127
          %v990 = vshll.u32 %v989, 23
          %v991 = vor.u32 4788187, %v990
          %v992 = vand.u32 2147483647, %v991
          %v994 = vcvt.s32.f32 %v987
          %v995 = vmul.f32 %v994, %v992
          %v996 = vxor.u32 %v995, 2147483648
          %v997 = vsel %vm914, %v996, %v995
          %v998 = vsub.s32 4, %v974
          %v999 = vsel %vm914, %v998, %v974
          %v1000 = vsel %vm913, %v792, %v997
          %v1001 = vsel %vm913, 0, %v999
          %v1002 = vcosq.f32.pop %v1000
          %v1003 = vsinq.f32.pop %v1000
          %vm1004 = vweird.f32 %v792
          %v1005 = vadd.s32 %v1001, 3
          %v1006 = vand.u32 %v1005, 3
          %vm1007 = vcmp.lt.s32.totalorder %v1006, 2
          %vm1008 = vcmp.eq.s32.totalorder %v1006, 0
          %v1009 = vxor.u32 %v1003, 2147483648
          %v1010 = vsel %vm1008, %v1002, %v1009
          %vm1011 = vcmp.eq.s32.totalorder %v1006, 2
          %v1012 = vxor.u32 %v1002, 2147483648
          %v1013 = vsel %vm1011, %v1012, %v1003
          %v1014 = vsel %vm1007, %v1010, %v1013
          %v1015 = vsel %vm1004, nan, %v1014
          %v1016 = vmul.f32 %v904, %v1015
          %v1017 = vadd.f32 %v911, %v1016
          %v1018 = vmul.f32 %v792, %v797
          %v1019 = vmul.f32 %v908, %v1018
          %v1020 = vadd.f32 %v1017, %v1019
          %v1021 = vstv %s778
          %v1022 = vadd.f32 %v460, %v1021
          %v1023 = vmul.f32 %v1022, 0.5
          %p1024 = scmp.le.s32.totalorder %s761, %s456
          %p1025 = scmp.ge.s32.totalorder %s762, %s457
          %p1026 = pnand %p1024, %p1025
          %p1027 = pneg %p1026
          // Predicated region
          $region85: #{tpu_custom_call.1} parent=83 // pred_check
            _
          $region86: #{tpu_custom_call.1} parent=83 // pred_check_branch
            %1029 = sbr.rel (%p1026) target = $region88
          $region87: #{tpu_custom_call.1} parent=83 // pred_region
            %1030 = vst [vmem:[%s433] sm:$0xff] %v910
            %1031 = vst [vmem:[%s440] sm:$0xff] %v1020
            %1032 = vst [vmem:[%s447] sm:$0xff] %v1023
          $region88: #{tpu_custom_call.1} parent=83 // pred_fallthru
            _
          %p1033 = pneg %p1027
          // Predicated region
          $region89: #{tpu_custom_call.1} parent=83 // pred_check
            _
          $region90: #{tpu_custom_call.1} parent=83 // pred_check_branch
            %1035 = sbr.rel (%p1027) target = $region92
          $region91: #{tpu_custom_call.1} parent=83 // pred_region
            %v1036 = vstv %s761
            %vm1037 = vcmp.ge.s32.totalorder %v471, %v1036
            %v1038 = vstv %s762
            %vm1039 = vcmp.lt.s32.totalorder %v471, %v1038
            %vm1040 = vmand %vm1037, %vm1039
            %v1041 = vld [vmem:[%s433] sm:$0xff]
            %v1042 = vsel %vm1040, %v910, %v1041
            %1043 = vst [vmem:[%s433] sm:$0xff] %v1042
            %v1044 = vld [vmem:[%s440] sm:$0xff]
            %v1045 = vsel %vm1040, %v1020, %v1044
            %1046 = vst [vmem:[%s440] sm:$0xff] %v1045
            %v1047 = vld [vmem:[%s447] sm:$0xff]
            %v1048 = vsel %vm1040, %v1023, %v1047
            %1049 = vst [vmem:[%s447] sm:$0xff] %v1048
          $region92: #{tpu_custom_call.1} parent=83 // pred_fallthru
            _
        $region84: #{tpu_custom_call.1} parent=47 // pred_fallthru
          _
        %s1050 = sld [smem:[#allocation3 + $0x2]]
        %s1051 = sld [smem:[#allocation3 + $0x3]]
        %p1052 = scmp.lt.s32.totalorder %s1050, %s457
        %p1053 = scmp.gt.s32.totalorder %s1051, %s456
        %p1054 = pnand %p1052, %p1053
        %p1055 = pneg %p1054
        // Predicated region
        $region93: #{tpu_custom_call.1} parent=47 // pred_check
          _
        $region94: #{tpu_custom_call.1} parent=47 // pred_check_branch
          %1057 = sbr.rel (%p1054) target = $region96
        $region95: #{tpu_custom_call.1} parent=47 // pred_region
          %s1058 = sld [smem:[#allocation4 + $0x100]]
          %s1059 = sld [smem:[#allocation4 + $0x101]]
          %s1060 = sld [smem:[#allocation4 + $0x102]]
          %s1061 = sld [smem:[#allocation4 + $0x103]]
          %s1062 = sld [smem:[#allocation9 + $0x100]]
          %s1063 = sld [smem:[#allocation9 + $0x101]]
          %s1064 = sld [smem:[#allocation10 + $0x100]]
          %s1065 = sld [smem:[#allocation10 + $0x101]]
          %s1066 = sld [smem:[#allocation10 + $0x102]]
          %s1067 = sld [smem:[#allocation12 + $0x100]]
          %v1068 = vstv %s1058
          %v1069 = vmul.f32 %v1068, %v458
          %v1070 = vstv %s1059
          %v1071 = vmul.f32 %v1070, %v459
          %v1072 = vadd.f32 %v1069, %v1071
          %v1073 = vstv %s1062
          %v1074 = vadd.f32 %v1072, %v1073
          %v1075 = vstv %s1060
          %v1076 = vmul.f32 %v1075, %v458
          %v1077 = vstv %s1061
          %v1078 = vmul.f32 %v1077, %v459
          %v1079 = vadd.f32 %v1076, %v1078
          %v1080 = vstv %s1063
          %v1081 = vadd.f32 %v1079, %v1080
          %v1082 = vmul.f32 %v1074, %v1074
          %v1083 = vmul.f32 %v1081, %v1081
          %v1084 = vadd.f32 %v1082, %v1083
          %v1085 = vadd.f32 %v1084, 1e-06
          %v1086 = vrcp.pop %v1085
          %v1087 = vstv %s1064
          %v1088 = vmul.f32 %v1087, %v1074
          %v1089 = vand.u32 2147483647, %v1074
          %vm1090 = vcmp.le.f32.partialorder %v1089, 0.7853982
          %vm1091 = vcmp.lt.s32.totalorder %v1074, 0
          %v1092 = vand.u32 %v1074, 2139095040
          %v1093 = vshrl.u32 %v1092, 23
          %v1094 = vsub.s32 %v1093, 127
          %v1095 = vand.u32 2147483647, %v1074
          %v1096 = vand.u32 %v1095, 8388607
          %v1097 = vor.u32 %v1096, 8388608
          %v1098 = vsub.s32 0, %v1097
          %v1099 = vadd.s32 %v1094, 1
          %vm1100 = vcmp.gt.s32.totalorder %v1099, 0
          %v1101 = vsel %vm1100, %v1099, 0
          %v1102 = vshrl.u32 %v1101, 5
          %v1103 = vand.u32 %v1101, 31
          %v1104 = vsub.s32 32, %v1103
          %v1105 = vshrl.u32 683565275, %v1104
          %v1106 = vshll.u32 683565275, %v1103
          %v1107 = vshrl.u32 2475754826, %v1104
          %v1108 = vor.u32 %v1106, %v1107
          %v1109 = vshll.u32 2475754826, %v1103
          %v1110 = vshrl.u32 2131351028, %v1104
          %v1111 = vor.u32 %v1109, %v1110
          %v1112 = vshll.u32 2131351028, %v1103
          %v1113 = vshrl.u32 2102212464, %v1104
          %v1114 = vor.u32 %v1112, %v1113
          %v1115 = vshll.u32 2102212464, %v1103
          %v1116 = vshrl.u32 920167782, %v1104
          %v1117 = vor.u32 %v1115, %v1116
          %v1118 = vshll.u32 920167782, %v1103
          %v1119 = vshrl.u32 1326507024, %v1104
          %v1120 = vor.u32 %v1118, %v1119
          %vm1121 = vcmp.lt.s32.totalorder %v1102, 1
          %vm1122 = vcmp.lt.s32.totalorder %v1102, 2
          %vm1123 = vcmp.lt.s32.totalorder %v1102, 3
          %vm1124 = vcmp.lt.s32.totalorder %v1102, 4
          %v1125 = vsel %vm1121, %v1105, %v1108
          %v1126 = vsel %vm1124, %v1114, 2102212464
          %v1127 = vsel %vm1123, %v1111, %v1126
          %v1128 = vsel %vm1122, %v1125, %v1127
          %v1129 = vsel %vm1121, %v1108, %v1111
          %v1130 = vsel %vm1124, %v1117, 920167782
          %v1131 = vsel %vm1123, %v1114, %v1130
          %v1132 = vsel %vm1122, %v1129, %v1131
          %v1133 = vsel %vm1121, %v1111, %v1114
          %v1134 = vsel %vm1124, %v1120, 1326507024
          %v1135 = vsel %vm1123, %v1117, %v1134
          %v1136 = vsel %vm1122, %v1133, %v1135
          %v1137 = vshll.u32 %v1097, 8
          %v1138 = vmul.u32.u64.compose %v1137, %v1136
          %v1139 = vextract.low.u32 %v1138
          %v1140 = vextract.high.u32 %v1138
          %v1141 = vmul.u32.u64.compose %v1137, %v1132
          %v1142 = vextract.low.u32 %v1141
          %v1143 = vextract.high.u32 %v1141
          %v1144 = vmul.u32 %v1137, %v1128
          %v1145 = vadd.s32 %v1140, %v1142
          %vm1146 = vc.u32 %v1140, %v1142
          %v1147 = vadd.s32 %v1143, 1
          %v1148 = vsel %vm1146, %v1147, %v1143
          %v1149 = vadd.s32 %v1144, %v1148
          %v1150 = vadd.s32 %v1149, 536870912
          %v1151 = vshrl.u32 %v1150, 30
          %v1152 = vshll.u32 %v1151, 30
          %v1153 = vsub.s32 %v1149, %v1152
          %vm1154 = vcmp.lt.s32.totalorder %v1153, 0
          %v1155 = vsub.s32 0, %v1153
          %v1156 = vsel %vm1154, %v1155, %v1153
          %v1157 = vclz %v1156
          %v1158 = vsub.s32 %v1157, 2
          %vm1159 = vcmp.gt.s32.totalorder 0, %v1158
          %v1160 = vsel %vm1159, 0, %v1158
          %v1161 = vsub.s32 32, %v1160
          %v1162 = vshll.u32 %v1153, %v1160
          %v1163 = vshrl.u32 %v1145, %v1161
          %v1164 = vor.u32 %v1162, %v1163
          %v1165 = vsub.s32 4294967266, %v1160
          %v1166 = vadd.s32 %v1165, 127
          %v1167 = vshll.u32 %v1166, 23
          %v1168 = vor.u32 4788187, %v1167
          %v1169 = vand.u32 2147483647, %v1168
          %v1171 = vcvt.s32.f32 %v1164
          %v1172 = vmul.f32 %v1171, %v1169
          %v1173 = vxor.u32 %v1172, 2147483648
          %v1174 = vsel %vm1091, %v1173, %v1172
          %v1175 = vsub.s32 4, %v1151
          %v1176 = vsel %vm1091, %v1175, %v1151
          %v1177 = vsel %vm1090, %v1074, %v1174
          %v1178 = vsel %vm1090, 0, %v1176
          %v1179 = vcosq.f32.pop %v1177
          %v1180 = vsinq.f32.pop %v1177
          %vm1181 = vweird.f32 %v1074
          %v1182 = vadd.s32 %v1178, 3
          %v1183 = vand.u32 %v1182, 3
          %vm1184 = vcmp.lt.s32.totalorder %v1183, 2
          %vm1185 = vcmp.eq.s32.totalorder %v1183, 0
          %v1186 = vxor.u32 %v1180, 2147483648
          %v1187 = vsel %vm1185, %v1179, %v1186
          %vm1188 = vcmp.eq.s32.totalorder %v1183, 2
          %v1189 = vxor.u32 %v1179, 2147483648
          %v1190 = vsel %vm1188, %v1189, %v1180
          %v1191 = vsel %vm1184, %v1187, %v1190
          %v1192 = vsel %vm1181, nan, %v1191
          %v1193 = vstv %s1065
          %v1194 = vmul.f32 %v1193, %v1192
          %v1195 = vadd.f32 %v1088, %v1194
          %v1196 = vmul.f32 %v1074, %v1086
          %v1197 = vstv %s1066
          %v1198 = vmul.f32 %v1197, %v1196
          %v1199 = vadd.f32 %v1195, %v1198
          %v1200 = vmul.f32 %v1087, %v1081
          %v1201 = vand.u32 2147483647, %v1081
          %vm1202 = vcmp.le.f32.partialorder %v1201, 0.7853982
          %vm1203 = vcmp.lt.s32.totalorder %v1081, 0
          %v1204 = vand.u32 %v1081, 2139095040
          %v1205 = vshrl.u32 %v1204, 23
          %v1206 = vsub.s32 %v1205, 127
          %v1207 = vand.u32 2147483647, %v1081
          %v1208 = vand.u32 %v1207, 8388607
          %v1209 = vor.u32 %v1208, 8388608
          %v1210 = vsub.s32 0, %v1209
          %v1211 = vadd.s32 %v1206, 1
          %vm1212 = vcmp.gt.s32.totalorder %v1211, 0
          %v1213 = vsel %vm1212, %v1211, 0
          %v1214 = vshrl.u32 %v1213, 5
          %v1215 = vand.u32 %v1213, 31
          %v1216 = vsub.s32 32, %v1215
          %v1217 = vshrl.u32 683565275, %v1216
          %v1218 = vshll.u32 683565275, %v1215
          %v1219 = vshrl.u32 2475754826, %v1216
          %v1220 = vor.u32 %v1218, %v1219
          %v1221 = vshll.u32 2475754826, %v1215
          %v1222 = vshrl.u32 2131351028, %v1216
          %v1223 = vor.u32 %v1221, %v1222
          %v1224 = vshll.u32 2131351028, %v1215
          %v1225 = vshrl.u32 2102212464, %v1216
          %v1226 = vor.u32 %v1224, %v1225
          %v1227 = vshll.u32 2102212464, %v1215
          %v1228 = vshrl.u32 920167782, %v1216
          %v1229 = vor.u32 %v1227, %v1228
          %v1230 = vshll.u32 920167782, %v1215
          %v1231 = vshrl.u32 1326507024, %v1216
          %v1232 = vor.u32 %v1230, %v1231
          %vm1233 = vcmp.lt.s32.totalorder %v1214, 1
          %vm1234 = vcmp.lt.s32.totalorder %v1214, 2
          %vm1235 = vcmp.lt.s32.totalorder %v1214, 3
          %vm1236 = vcmp.lt.s32.totalorder %v1214, 4
          %v1237 = vsel %vm1233, %v1217, %v1220
          %v1238 = vsel %vm1236, %v1226, 2102212464
          %v1239 = vsel %vm1235, %v1223, %v1238
          %v1240 = vsel %vm1234, %v1237, %v1239
          %v1241 = vsel %vm1233, %v1220, %v1223
          %v1242 = vsel %vm1236, %v1229, 920167782
          %v1243 = vsel %vm1235, %v1226, %v1242
          %v1244 = vsel %vm1234, %v1241, %v1243
          %v1245 = vsel %vm1233, %v1223, %v1226
          %v1246 = vsel %vm1236, %v1232, 1326507024
          %v1247 = vsel %vm1235, %v1229, %v1246
          %v1248 = vsel %vm1234, %v1245, %v1247
          %v1249 = vshll.u32 %v1209, 8
          %v1250 = vmul.u32.u64.compose %v1249, %v1248
          %v1251 = vextract.low.u32 %v1250
          %v1252 = vextract.high.u32 %v1250
          %v1253 = vmul.u32.u64.compose %v1249, %v1244
          %v1254 = vextract.low.u32 %v1253
          %v1255 = vextract.high.u32 %v1253
          %v1256 = vmul.u32 %v1249, %v1240
          %v1257 = vadd.s32 %v1252, %v1254
          %vm1258 = vc.u32 %v1252, %v1254
          %v1259 = vadd.s32 %v1255, 1
          %v1260 = vsel %vm1258, %v1259, %v1255
          %v1261 = vadd.s32 %v1256, %v1260
          %v1262 = vadd.s32 %v1261, 536870912
          %v1263 = vshrl.u32 %v1262, 30
          %v1264 = vshll.u32 %v1263, 30
          %v1265 = vsub.s32 %v1261, %v1264
          %vm1266 = vcmp.lt.s32.totalorder %v1265, 0
          %v1267 = vsub.s32 0, %v1265
          %v1268 = vsel %vm1266, %v1267, %v1265
          %v1269 = vclz %v1268
          %v1270 = vsub.s32 %v1269, 2
          %vm1271 = vcmp.gt.s32.totalorder 0, %v1270
          %v1272 = vsel %vm1271, 0, %v1270
          %v1273 = vsub.s32 32, %v1272
          %v1274 = vshll.u32 %v1265, %v1272
          %v1275 = vshrl.u32 %v1257, %v1273
          %v1276 = vor.u32 %v1274, %v1275
          %v1277 = vsub.s32 4294967266, %v1272
          %v1278 = vadd.s32 %v1277, 127
          %v1279 = vshll.u32 %v1278, 23
          %v1280 = vor.u32 4788187, %v1279
          %v1281 = vand.u32 2147483647, %v1280
          %v1283 = vcvt.s32.f32 %v1276
          %v1284 = vmul.f32 %v1283, %v1281
          %v1285 = vxor.u32 %v1284, 2147483648
          %v1286 = vsel %vm1203, %v1285, %v1284
          %v1287 = vsub.s32 4, %v1263
          %v1288 = vsel %vm1203, %v1287, %v1263
          %v1289 = vsel %vm1202, %v1081, %v1286
          %v1290 = vsel %vm1202, 0, %v1288
          %v1291 = vcosq.f32.pop %v1289
          %v1292 = vsinq.f32.pop %v1289
          %vm1293 = vweird.f32 %v1081
          %v1294 = vadd.s32 %v1290, 3
          %v1295 = vand.u32 %v1294, 3
          %vm1296 = vcmp.lt.s32.totalorder %v1295, 2
          %vm1297 = vcmp.eq.s32.totalorder %v1295, 0
          %v1298 = vxor.u32 %v1292, 2147483648
          %v1299 = vsel %vm1297, %v1291, %v1298
          %vm1300 = vcmp.eq.s32.totalorder %v1295, 2
          %v1301 = vxor.u32 %v1291, 2147483648
          %v1302 = vsel %vm1300, %v1301, %v1292
          %v1303 = vsel %vm1296, %v1299, %v1302
          %v1304 = vsel %vm1293, nan, %v1303
          %v1305 = vmul.f32 %v1193, %v1304
          %v1306 = vadd.f32 %v1200, %v1305
          %v1307 = vmul.f32 %v1081, %v1086
          %v1308 = vmul.f32 %v1197, %v1307
          %v1309 = vadd.f32 %v1306, %v1308
          %v1310 = vstv %s1067
          %v1311 = vadd.f32 %v460, %v1310
          %v1312 = vmul.f32 %v1311, 0.5
          %p1313 = scmp.le.s32.totalorder %s1050, %s456
          %p1314 = scmp.ge.s32.totalorder %s1051, %s457
          %p1315 = pnand %p1313, %p1314
          %p1316 = pneg %p1315
          // Predicated region
          $region97: #{tpu_custom_call.1} parent=95 // pred_check
            _
          $region98: #{tpu_custom_call.1} parent=95 // pred_check_branch
            %1318 = sbr.rel (%p1315) target = $region100
          $region99: #{tpu_custom_call.1} parent=95 // pred_region
            %1319 = vst [vmem:[%s433] sm:$0xff] %v1199
            %1320 = vst [vmem:[%s440] sm:$0xff] %v1309
            %1321 = vst [vmem:[%s447] sm:$0xff] %v1312
          $region100: #{tpu_custom_call.1} parent=95 // pred_fallthru
            _
          %p1322 = pneg %p1316
          // Predicated region
          $region101: #{tpu_custom_call.1} parent=95 // pred_check
            _
          $region102: #{tpu_custom_call.1} parent=95 // pred_check_branch
            %1324 = sbr.rel (%p1316) target = $region104
          $region103: #{tpu_custom_call.1} parent=95 // pred_region
            %v1325 = vstv %s1050
            %vm1326 = vcmp.ge.s32.totalorder %v471, %v1325
            %v1327 = vstv %s1051
            %vm1328 = vcmp.lt.s32.totalorder %v471, %v1327
            %vm1329 = vmand %vm1326, %vm1328
            %v1330 = vld [vmem:[%s433] sm:$0xff]
            %v1331 = vsel %vm1329, %v1199, %v1330
            %1332 = vst [vmem:[%s433] sm:$0xff] %v1331
            %v1333 = vld [vmem:[%s440] sm:$0xff]
            %v1334 = vsel %vm1329, %v1309, %v1333
            %1335 = vst [vmem:[%s440] sm:$0xff] %v1334
            %v1336 = vld [vmem:[%s447] sm:$0xff]
            %v1337 = vsel %vm1329, %v1312, %v1336
            %1338 = vst [vmem:[%s447] sm:$0xff] %v1337
          $region104: #{tpu_custom_call.1} parent=95 // pred_fallthru
            _
        $region96: #{tpu_custom_call.1} parent=47 // pred_fallthru
          _
        %s1339 = sand.u32 %s211, 1
        %s1340 = scalar_lea.sflag [#allocation6], %s1339
        %s1341 = sand.u32 %s211, 1
        %s1342 = smul.addr %s1341, 8
        %s1343 = scalar_lea.vmem [#allocation15], %s1342
        %s1344 = sand.u32 %s41, 1
        %s1345 = scalar_lea.sflag [#allocation17], %s1344
        %s1346 = sand.u32 %s237, 1
        %s1347 = smul.addr %s1346, 8
        %s1348 = scalar_lea.vmem [#allocation16], %s1347
        %s1349 = sand.u32 %s41, 1
        %s1350 = scalar_lea.sflag [#allocation17], %s1349
        %s1351 = sand.u32 %s263, 1
        %s1352 = smul.addr %s1351, 8
        %s1353 = scalar_lea.vmem [#allocation18], %s1352
        // Predicated region
        $region105: #{tpu_custom_call.1} parent=47 // pred_check
          %p1354 = pneg %p221
        $region106: #{tpu_custom_call.1} parent=47 // pred_check_branch
          %1356 = sbr.rel (%p1354) target = $region108
        $region107: #{tpu_custom_call.1} parent=47 // pred_region
          %s1358 = ssub.s32 128, 128
          %1359 = vsyncadd %s1340, %s1358
          %s1360 = smul.addr %s41, 128
          %s1361 = scalar_lea.hbm %s8, %s1360
          %s1363 = sshll.u32 %s1343, 4
          %s1364 = int_to_ptr.vmem [resolvable:$true] %s1363
          %1366 = dma.vmem_to_hbm [thread:$0]  %s1364, 128, %s1361, %s1340
        $region108: #{tpu_custom_call.1} parent=47 // pred_fallthru
          _
        // Predicated region
        $region109: #{tpu_custom_call.1} parent=47 // pred_check
          %p1367 = pneg %p247
        $region110: #{tpu_custom_call.1} parent=47 // pred_check_branch
          %1369 = sbr.rel (%p1367) target = $region112
        $region111: #{tpu_custom_call.1} parent=47 // pred_region
          %s1371 = ssub.s32 128, 128
          %1372 = vsyncadd %s1345, %s1371
          %s1373 = smul.addr %s41, 128
          %s1374 = scalar_lea.hbm %s9, %s1373
          %s1376 = sshll.u32 %s1348, 4
          %s1377 = int_to_ptr.vmem [resolvable:$true] %s1376
          %1379 = dma.vmem_to_hbm [thread:$0]  %s1377, 128, %s1374, %s1345
        $region112: #{tpu_custom_call.1} parent=47 // pred_fallthru
          _
        // Predicated region
        $region113: #{tpu_custom_call.1} parent=47 // pred_check
          %p1380 = pneg %p273
        $region114: #{tpu_custom_call.1} parent=47 // pred_check_branch
          %1382 = sbr.rel (%p1380) target = $region116
        $region115: #{tpu_custom_call.1} parent=47 // pred_region
          %s1384 = ssub.s32 128, 128
          %1385 = vsyncadd %s1350, %s1384
          %s1386 = smul.addr %s41, 128
          %s1387 = scalar_lea.hbm %s10, %s1386
          %s1389 = sshll.u32 %s1353, 4
          %s1390 = int_to_ptr.vmem [resolvable:$true] %s1389
          %1392 = dma.vmem_to_hbm [thread:$0]  %s1390, 128, %s1387, %s1350
        $region116: #{tpu_custom_call.1} parent=47 // pred_fallthru
          _
      $region48: #{tpu_custom_call.1} parent=5 // pred_fallthru
        _
      %p1393 = scmp.le.s32.totalorder 2, %s36
      // Predicated region
      $region117: #{tpu_custom_call.1} parent=5 // pred_check
        %p1394 = pneg %p1393
      $region118: #{tpu_custom_call.1} parent=5 // pred_check_branch
        %1396 = sbr.rel (%p1394) target = $region120
      $region119: #{tpu_custom_call.1} parent=5 // pred_region
        %s1397 = ssub.s32 %s36, 2
        // Predicated region
        $region121: #{tpu_custom_call.1} parent=119 // pred_check
          %p1398 = pneg %p227
        $region122: #{tpu_custom_call.1} parent=119 // pred_check_branch
          %1400 = sbr.rel (%p1398) target = $region124
        $region123: #{tpu_custom_call.1} parent=119 // pred_region
          %s1401 = sand.u32 %s212, 1
          %s1402 = scalar_lea.sflag [#allocation6], %s1401
          %s1403 = sand.u32 %s212, 1
          %s1404 = smul.addr %s1403, 8
          %s1405 = scalar_lea.vmem [#allocation15], %s1404
          %1406 = dma.done %s1402, 128
        $region124: #{tpu_custom_call.1} parent=119 // pred_fallthru
          _
        // Predicated region
        $region125: #{tpu_custom_call.1} parent=119 // pred_check
          %p1407 = pneg %p253
        $region126: #{tpu_custom_call.1} parent=119 // pred_check_branch
          %1409 = sbr.rel (%p1407) target = $region128
        $region127: #{tpu_custom_call.1} parent=119 // pred_region
          %s1410 = sand.u32 %s42, 1
          %s1411 = scalar_lea.sflag [#allocation17], %s1410
          %s1412 = sand.u32 %s238, 1
          %s1413 = smul.addr %s1412, 8
          %s1414 = scalar_lea.vmem [#allocation16], %s1413
          %1415 = dma.done %s1411, 128
        $region128: #{tpu_custom_call.1} parent=119 // pred_fallthru
          _
        // Predicated region
        $region129: #{tpu_custom_call.1} parent=119 // pred_check
          %p1416 = pneg %p279
        $region130: #{tpu_custom_call.1} parent=119 // pred_check_branch
          %1418 = sbr.rel (%p1416) target = $region132
        $region131: #{tpu_custom_call.1} parent=119 // pred_region
          %s1419 = sand.u32 %s42, 1
          %s1420 = scalar_lea.sflag [#allocation17], %s1419
          %s1421 = sand.u32 %s264, 1
          %s1422 = smul.addr %s1421, 8
          %s1423 = scalar_lea.vmem [#allocation18], %s1422
          %1424 = dma.done %s1420, 128
        $region132: #{tpu_custom_call.1} parent=119 // pred_fallthru
          _
      $region120: #{tpu_custom_call.1} parent=5 // pred_fallthru
        _
    $region6: #{tpu_custom_call.1} parent=1 // loop_footer
      %s40 = sadd.s32 1, %s36
    $region7: #{tpu_custom_call.1} parent=1 // loop_footer_branch
      %35 = sbr.rel target = $region3
    $region8: #{tpu_custom_call.1} parent=1 // loop_exit
      _
    %1425 = vsyncpa [#allocation5], 1
    %s1426 = scalar_lea.sflag [#allocation5], 1
    %1427 = vsyncpa %s1426, 1
    %1428 = vsyncpa [#allocation6], 1
    %s1429 = scalar_lea.sflag [#allocation6], 1
    %1430 = vsyncpa %s1429, 1
    %1431 = vsyncpa [#allocation17], 1
    %s1432 = scalar_lea.sflag [#allocation17], 1
    %1433 = vsyncpa %s1432, 1
    %1434 = vsyncpa [#allocation7], 1
    %s1435 = scalar_lea.sflag [#allocation7], 1
    %1436 = vsyncpa %s1435, 1
    %1437 = vsyncpa [#allocation11], 1
    %1438 = vsyncpa [#allocation8], 1
    %s1439 = scalar_lea.sflag [#allocation8], 1
    %1440 = vsyncpa %s1439, 1
    %1441 = vsyncpa [#allocation13], 1

</llo_original>
